<compile_context>
chip_gen: v7x
topology: tpu7x:2x2x1
jax: 0.10.0
libtpu: 0.0.40
codegen_flags: <defaults>
</compile_context>

<pallas_src>
import functools

import jax
import jax.numpy as jnp
from jax import lax
from jax.experimental import pallas as pl
from jax.experimental.pallas import tpu as pltpu

_INV_SQRT2 = 0.7071067811865476


def _erf_approx(x):
    # Abramowitz & Stegun 7.1.26; with the EUP approx reciprocal this matches
    # torch's exact-erf GELU to ~1e-4 (well inside the test tolerance).
    p = 0.3275911
    a1, a2, a3, a4, a5 = (0.254829592, -0.284496736, 1.421413741,
                          -1.453152027, 1.061405429)
    sgn = jnp.where(x >= 0.0, 1.0, -1.0)
    ax = jnp.abs(x)
    t = pl.reciprocal(1.0 + p * ax, approx=True)   # EUP slot, off the VALU
    poly = ((((a5 * t + a4) * t + a3) * t + a2) * t + a1) * t
    return sgn * (1.0 - poly * jnp.exp(-ax * ax))


def _gelu_exact(x):
    # TODO(synk): on v6e/v7x the polynomial could run in bf16 (VPU packs 2x);
    # kept f32 to stay bit-close to torch's exact GELU (v5e has no bf16 VPU).
    return 0.5 * x * (1.0 + _erf_approx(x * _INV_SQRT2))


# ----------------------------- fused Pallas kernel ---------------------------

def resmlp_fused_kernel(patches_ref, wp_ref, bp_ref, aff_ref, wtok_ref,
                        btok_ref, w1_ref, b1_ref, w2_ref, wc_ref, bc_ref,
                        out_ref, acc_ref, *, num_real_patches, ff_chunk):
    # acc_ref: (Bt*Pp, F) f32 VMEM scratch holding the activation, resident
    # across the layer grid axis.  NOTE: correctness relies on the layer axis
    # being the innermost ("arbitrary") grid axis; the batch axis is the
    # "parallel" one (each megacore core gets its own scratch).
    layer = pl.program_id(1)
    bf16 = jnp.bfloat16
    Bt, Pp, K = patches_ref.shape
    F = wp_ref.shape[1]
    R = Bt * Pp

    # ---- layer 0: patch embedding into the VMEM-resident activation --------
    @pl.when(layer == 0)
    def _embed():
        pf = patches_ref[...].reshape(R, K)                     # bf16
        acc_ref[...] = (jnp.dot(pf, wp_ref[...],
                                preferred_element_type=jnp.float32)
                        + bp_ref[...])

    # ---- per-layer packed (8, F) affine slab --------------------------------
    aff = aff_ref[...]
    a1c, b1c, a2c, b2c = aff[0:1], aff[1:2], aff[2:3], aff[3:4]
    a1f, b1f, a2f, bb2 = aff[4:5], aff[5:6], aff[6:7], aff[7:8]

    # ---- CommunicationLayer (token mixing): ONE wide MXU dot ----------------
    # Residual is the post-aff1 activation (matches the PyTorch module).
    x = acc_ref[...]                                            # (R, F)  f32
    xa = a1c * x + b1c                                          # residual
    xa_bf = xa.astype(bf16)
    wide = jnp.concatenate(
        [xa_bf[b * Pp:(b + 1) * Pp, :] for b in range(Bt)], axis=1)
    t_wide = (jnp.dot(wtok_ref[...], wide,                      # (Pp, Bt*F)
                      preferred_element_type=jnp.float32)
              + btok_ref[...])                                  # (Pp, 1) bias
    t = jnp.concatenate(
        [t_wide[:, b * F:(b + 1) * F] for b in range(Bt)], axis=0)   # (R, F)
    acc_ref[...] = a2c * t + b2c + xa

    # ---- FeedForward, chunked over token rows (bounds VMEM for large Bt) ----
    def ff_rows(row0):
        xr = acc_ref[pl.ds(row0, ff_chunk), :]
        xf = a1f * xr + b1f                                     # residual
        h = (jnp.dot(xf.astype(bf16), w1_ref[...],
                     preferred_element_type=jnp.float32) + b1_ref[...])
        h = _gelu_exact(h)
        y = jnp.dot(h.astype(bf16), w2_ref[...],
                    preferred_element_type=jnp.float32)
        acc_ref[pl.ds(row0, ff_chunk), :] = a2f * y + bb2 + xf  # bb2=a2f*b2+beta2

    n_chunks = R // ff_chunk
    if n_chunks == 1:
        ff_rows(0)
    else:
        def body(c, carry):
            ff_rows(pl.multiple_of(c * ff_chunk, 8))
            return carry
        lax.fori_loop(0, n_chunks, body, 0, unroll=False)

    # ---- last layer: fused mean-pool (real patch rows only) + classifier ----
    @pl.when(layer == pl.num_programs(1) - 1)
    def _head():
        pooled = [
            jnp.mean(acc_ref[pl.ds(b * Pp, num_real_patches), :],
                     axis=0, keepdims=True)
            for b in range(Bt)]
        m = jnp.concatenate(pooled, axis=0)                     # (Bt, F) f32
        out_ref[...] = (jnp.dot(m.astype(bf16), wc_ref[...],
                                preferred_element_type=jnp.float32)
                        + bc_ref[...])


# ------------------------------ host-side glue --------------------------------

def _round_up(n, m):
    return ((n + m - 1) // m) * m


def extract_patches(x, ps):
    # (B, C, H, W) -> (B, P, C*ps*ps), matching Conv2d(kernel=stride=ps) im2col.
    B, C, Hh, Ww = x.shape
    Hp, Wp = Hh // ps, Ww // ps
    x = x.reshape(B, C, Hp, ps, Wp, ps)
    x = x.transpose(0, 2, 4, 1, 3, 5)          # (B, Hp, Wp, C, ps, ps)
    return x.reshape(B, Hp * Wp, C * ps * ps)


def init_params(key, *, in_channels, patch_size, num_features, num_patches,
                expansion_factor, num_layers, num_classes):
    """Kernel-ready params: stacked per-layer weights (bf16 matmul operands),
    packed (8, F) affine slab, P padded to a multiple of 8."""
    F_, P = num_features, num_patches
    Pp = _round_up(P, 8)
    H = num_features * expansion_factor
    K = in_channels * patch_size * patch_size
    keys = iter(jax.random.split(key, 4 + 6 * num_layers))

    def uni(k, shape, fan_in):
        bound = 1.0 / (fan_in ** 0.5)
        return jax.random.uniform(k, shape, jnp.float32, -bound, bound)

    conv_w = uni(next(keys), (F_, in_channels, patch_size, patch_size), K)
    conv_b = uni(next(keys), (F_,), K)
    clf_w = uni(next(keys), (num_classes, F_), F_)
    clf_b = uni(next(keys), (num_classes,), F_)

    ones = jnp.ones((1, F_), jnp.float32)
    zeros = jnp.zeros((1, F_), jnp.float32)

    aff_l, wtok_l, btok_l, w1_l, b1_l, w2_l = [], [], [], [], [], []
    for _ in range(num_layers):
        wtok = uni(next(keys), (P, P), P)
        btok = uni(next(keys), (P,), P)
        fc1_w = uni(next(keys), (H, F_), F_)
        fc1_b = uni(next(keys), (H,), F_)
        fc2_w = uni(next(keys), (F_, H), H)
        fc2_b = uni(next(keys), (F_,), H)
        # AffineTransform init: alpha = 1, beta = 0 (folding below stays general).
        a1c, b1c, a2c, b2c = ones, zeros, ones, zeros
        a1f, b1f, a2f, b2f = ones, zeros, ones, zeros
        # Fold fc2 bias with the FF output affine:
        #   a2f*(h@W2 + b2) + beta2 = a2f*(h@W2) + (a2f*b2 + beta2)
        bb2 = a2f * fc2_b.reshape(1, F_) + b2f
        aff = jnp.concatenate([a1c, b1c, a2c, b2c, a1f, b1f, a2f, bb2], axis=0)
        aff_l.append(aff)                                       # (8, F)
        # Zero-pad the token-mix weight: padded columns are exactly 0 so padded
        # patch rows never leak into real rows.
        wtok_l.append(jnp.pad(wtok, ((0, Pp - P), (0, Pp - P))))
        btok_l.append(jnp.pad(btok.reshape(P, 1), ((0, Pp - P), (0, 0))))
        w1_l.append(fc1_w.T)                                    # (F, H)
        b1_l.append(fc1_b.reshape(1, H))
        w2_l.append(fc2_w.T)                                    # (H, F)

    return dict(
        wp_t=conv_w.reshape(F_, K).T.astype(jnp.bfloat16),      # (K, F)
        bp=conv_b.reshape(1, F_),
        aff=jnp.stack(aff_l),                                   # (L, 8, F)   f32
        wtok=jnp.stack(wtok_l).astype(jnp.bfloat16),            # (L, Pp, Pp)
        btok=jnp.stack(btok_l),                                 # (L, Pp, 1)  f32
        w1=jnp.stack(w1_l).astype(jnp.bfloat16),                # (L, F, H)
        b1=jnp.stack(b1_l),                                     # (L, 1, H)   f32
        w2=jnp.stack(w2_l).astype(jnp.bfloat16),                # (L, H, F)
        wc_t=clf_w.T.astype(jnp.bfloat16),                      # (F, C)
        bc=clf_b.reshape(1, num_classes),
    )


def _nbytes(shape, dtype):
    n = 1
    for s in shape:
        n *= s
    return n * jnp.dtype(dtype).itemsize


def _padded_nbytes(shape, dtype):
    # VMEM footprint of one buffer: minor dim padded to 128 lanes, second-minor
    # padded to the sublane tile (8 for 4-byte dtypes, 16 for 2-byte).
    itemsize = jnp.dtype(dtype).itemsize
    dims = list(shape) if shape else [1]
    dims[-1] = _round_up(dims[-1], 128)
    if len(dims) >= 2:
        dims[-2] = _round_up(dims[-2], 32 // itemsize)
    n = 1
    for d in dims:
        n *= d
    return n * itemsize


def _ff_chunk_rows(R):
    if R <= 512:
        return R
    for c in range(512, 7, -8):
        if R % c == 0:
            return c
    return R


def _vmem_capacity_bytes():
    # Generation-aware capacity (128 MiB on v5e/v6e, 64 MiB per core on v7x).
    try:
        return int(pltpu.get_tpu_info().vmem_capacity_bytes)
    except Exception:   # conservative (v7x-sized) fallback
        return 64 << 20


def _vmem_estimate_bytes(Bt, Pp, K, F_, H, C):
    """Honest per-core VMEM estimate: double-buffered pipeline blocks +
    resident activation scratch + CL/FF transient values + headroom."""
    R = Bt * Pp
    ch = _ff_chunk_rows(R)
    bf16, f32 = jnp.bfloat16, jnp.float32
    blocks = 2 * (
        _padded_nbytes((Bt, Pp, K), bf16)                       # patches
        + _padded_nbytes((K, F_), bf16) + _padded_nbytes((1, F_), f32)
        + _padded_nbytes((8, F_), f32)                          # affine slab
        + _padded_nbytes((Pp, Pp), bf16)                        # token-mix W
        + _padded_nbytes((Pp, 1), f32)                          # token-mix b
        + _padded_nbytes((F_, H), bf16) + _padded_nbytes((1, H), f32)
        + _padded_nbytes((H, F_), bf16)
        + _padded_nbytes((F_, C), bf16) + _padded_nbytes((1, C), f32)
        + _padded_nbytes((Bt, C), f32))                         # output block
    acc = _padded_nbytes((R, F_), f32)
    cl_tmp = R * _round_up(F_, 128) * 14          # xa f32+bf16, wide, t_wide, out
    ff_tmp = ch * (10 * _round_up(F_, 128) + 6 * _round_up(H, 128))
    return blocks + acc + max(cl_tmp, ff_tmp) + (4 << 20)


def _pick_batch_tile(B, Pp, K, F_, H, C, budget):
    best_any, best_multi = None, None
    for d in range(1, min(B, 64) + 1):
        if B % d:
            continue
        if _vmem_estimate_bytes(d, Pp, K, F_, H, C) > budget:
            continue
        best_any = d
        if B // d >= 2:           # keep >= 2 grid steps on the "parallel" axis
            best_multi = d
    if best_multi is not None:
        return best_multi
    return best_any if best_any is not None else 1


def resmlp_forward(x, params, *, patch_size, batch_tile=None):
    B = x.shape[0]
    patches = extract_patches(x, patch_size)                    # (B, P, K) f32
    P, K = patches.shape[1], patches.shape[2]
    F_ = params["wp_t"].shape[1]
    H = params["w1"].shape[2]
    C = params["wc_t"].shape[1]
    L = params["aff"].shape[0]
    Pp = params["wtok"].shape[1]                                # padded patches
    assert Pp % 8 == 0 and Pp >= P

    if Pp != P:                                                 # zero pad rows
        patches = jnp.pad(patches, ((0, 0), (0, Pp - P), (0, 0)))
    patches = patches.astype(jnp.bfloat16)

    vmem_cap = _vmem_capacity_bytes()
    vmem_budget = (vmem_cap * 4) // 5          # ~20% headroom (v7x ~51 MiB, v6e ~102 MiB)
    if batch_tile is None:
        batch_tile = _pick_batch_tile(B, Pp, K, F_, H, C, vmem_budget)
    Bt = batch_tile
    assert B % Bt == 0, "batch must be divisible by the batch tile"
    NB = B // Bt
    R = Bt * Pp
    ff_chunk = _ff_chunk_rows(R)

    batch3 = lambda i, l: (i, 0, 0)
    layer3 = lambda i, l: (l, 0, 0)
    fixed2 = lambda i, l: (0, 0)

    in_specs = [
        pl.BlockSpec((Bt, Pp, K), batch3),      # patches (once per batch tile)
        pl.BlockSpec((K, F_), fixed2),          # patch-embed weight (bf16)
        pl.BlockSpec((1, F_), fixed2),          # patch-embed bias
        pl.BlockSpec((None, 8, F_), layer3),    # packed per-layer affine slab
        pl.BlockSpec((None, Pp, Pp), layer3),   # token-mix weight
        pl.BlockSpec((None, Pp, 1), layer3),    # token-mix bias (rank-1 stream)
        pl.BlockSpec((None, F_, H), layer3),    # ff fc1 weight
        pl.BlockSpec((None, 1, H), layer3),     # ff fc1 bias
        pl.BlockSpec((None, H, F_), layer3),    # ff fc2 weight
        pl.BlockSpec((F_, C), fixed2),          # classifier weight
        pl.BlockSpec((1, C), fixed2),           # classifier bias
    ]
    out_specs = pl.BlockSpec((None, Bt, C), batch3)
    out_shape = jax.ShapeDtypeStruct((NB, Bt, C), jnp.float32)

    vmem_limit = int(min(max(_vmem_estimate_bytes(Bt, Pp, K, F_, H, C) + (8 << 20),
                             32 << 20),
                         vmem_budget))

    flops = int(2 * B * Pp * K * F_
                + L * B * Pp * (2 * Pp * F_ + 4 * F_ * H)
                + 2 * B * F_ * C)
    transcendentals = int(L * B * Pp * H)       # exp inside the erf-GELU
    layer_bytes = (_nbytes((8, F_), jnp.float32) + _nbytes((Pp, Pp), jnp.bfloat16)
                   + _nbytes((Pp, 1), jnp.float32) + _nbytes((F_, H), jnp.bfloat16)
                   + _nbytes((1, H), jnp.float32) + _nbytes((H, F_), jnp.bfloat16))
    bytes_accessed = int(_nbytes((B, Pp, K), jnp.bfloat16) + NB * L * layer_bytes
                         + _nbytes((K, F_), jnp.bfloat16) + _nbytes((1, F_), jnp.float32)
                         + _nbytes((F_, C), jnp.bfloat16) + _nbytes((1, C), jnp.float32)
                         + _nbytes((B, C), jnp.float32))

    kernel = functools.partial(resmlp_fused_kernel,
                               num_real_patches=P, ff_chunk=ff_chunk)
    logits = pl.pallas_call(
        kernel,
        grid=(NB, L),                            # layer axis MUST stay innermost
        in_specs=in_specs,
        out_specs=out_specs,
        out_shape=out_shape,
        scratch_shapes=[pltpu.VMEM((R, F_), jnp.float32)],
        compiler_params=pltpu.CompilerParams(
            dimension_semantics=("parallel", "arbitrary"),
            vmem_limit_bytes=vmem_limit),
        cost_estimate=pl.CostEstimate(flops=flops,
                                      transcendentals=transcendentals,
                                      bytes_accessed=bytes_accessed),
    )(patches, params["wp_t"], params["bp"], params["aff"], params["wtok"],
      params["btok"], params["w1"], params["b1"], params["w2"],
      params["wc_t"], params["bc"])

    return logits.reshape(B, C)


# ------------------------- pure-JAX reference (f32 math) ----------------------

def ref_forward(x, params, *, patch_size):
    # Emulates the kernel's bf16 matmul-operand quantization so the check is tight.
    bf = lambda a: a.astype(jnp.bfloat16).astype(jnp.float32)
    f32 = lambda a: a.astype(jnp.float32)

    patches = bf(extract_patches(x, patch_size))                # (B, P, K)
    P = patches.shape[1]
    e = patches @ f32(params["wp_t"]) + params["bp"]
    L = params["aff"].shape[0]
    for l in range(L):
        aff = params["aff"][l]
        a1c, b1c, a2c, b2c = aff[0:1], aff[1:2], aff[2:3], aff[3:4]
        a1f, b1f, a2f, bb2 = aff[4:5], aff[5:6], aff[6:7], aff[7:8]
        wtok = f32(params["wtok"][l][:P, :P])
        btok = params["btok"][l][:P, 0]
        w1 = f32(params["w1"][l]); b1 = params["b1"][l]
        w2 = f32(params["w2"][l])

        xa = a1c * e + b1c                                      # residual (post-aff1)
        t = jnp.einsum("pq,bqf->bpf", wtok, bf(xa)) + btok[None, :, None]
        e = a2c * t + b2c + xa

        xf = a1f * e + b1f                                      # residual (post-aff1)
        h = bf(xf) @ w1 + b1
        h = jax.nn.gelu(h, approximate=False)
        e = a2f * (bf(h) @ w2) + bb2 + xf

    m = e.mean(axis=1)
    return bf(m) @ f32(params["wc_t"]) + params["bc"]


if __name__ == "__main__":
    B, C_IN, IMG, PS = 4, 3, 16, 4
    F_, EXP, LAYERS, CLASSES = 128, 2, 2, 10
    P = (IMG // PS) ** 2

    key = jax.random.PRNGKey(0)
    kx, kp = jax.random.split(key)
    x = jax.random.normal(kx, (B, C_IN, IMG, IMG), jnp.float32)
    params = init_params(kp, in_channels=C_IN, patch_size=PS, num_features=F_,
                         num_patches=P, expansion_factor=EXP,
                         num_layers=LAYERS, num_classes=CLASSES)

    logits = resmlp_forward(x, params, patch_size=PS)   # auto batch_tile (-> 2 here)
    logits = jax.block_until_ready(logits)
    assert logits.shape == (B, CLASSES)

    ref = ref_forward(x, params, patch_size=PS)
    err = float(jnp.max(jnp.abs(logits - ref)))
    assert err < 1e-2, f"kernel/reference mismatch: {err}"

    print("KERNEL_OK")
</pallas_src>

<mosaic_0001>
module attributes {stable_mosaic.version = 11 : i64} {
  func.func @resmlp_fused_kernel(%arg0: i32, %arg1: i32, %arg2: memref<2x16x48xbf16, #tpu.memory_space<vmem>>, %arg3: memref<48x128xbf16, #tpu.memory_space<vmem>>, %arg4: memref<1x128xf32, #tpu.memory_space<vmem>>, %arg5: memref<1x8x128xf32, #tpu.memory_space<vmem>>, %arg6: memref<1x16x16xbf16, #tpu.memory_space<vmem>>, %arg7: memref<1x16x1xf32, #tpu.memory_space<vmem>>, %arg8: memref<1x128x256xbf16, #tpu.memory_space<vmem>>, %arg9: memref<1x1x256xf32, #tpu.memory_space<vmem>>, %arg10: memref<1x256x128xbf16, #tpu.memory_space<vmem>>, %arg11: memref<128x10xbf16, #tpu.memory_space<vmem>>, %arg12: memref<1x10xf32, #tpu.memory_space<vmem>>, %arg13: memref<1x2x10xf32, #tpu.memory_space<vmem>>, %arg14: memref<32x128xf32, #tpu.memory_space<vmem>>) attributes {dimension_semantics = [#tpu.dimension_semantics<parallel>, #tpu.dimension_semantics<arbitrary>], iteration_bounds = array<i64: 2, 2>, scalar_prefetch = 0 : i64, scratch_operands = 1 : i64, tpu.core_type = #tpu.core_type<tc>, window_params = [{transform_indices = @transform_0, window_bounds = array<i64: 2, 16, 48>}, {pipeline_mode = #tpu.pipeline_mode<synchronous>, transform_indices = @transform_1, window_bounds = array<i64: 48, 128>}, {pipeline_mode = #tpu.pipeline_mode<synchronous>, transform_indices = @transform_2, window_bounds = array<i64: 1, 128>}, {transform_indices = @transform_3, window_bounds = array<i64: 1, 8, 128>}, {transform_indices = @transform_4, window_bounds = array<i64: 1, 16, 16>}, {transform_indices = @transform_5, window_bounds = array<i64: 1, 16, 1>}, {transform_indices = @transform_6, window_bounds = array<i64: 1, 128, 256>}, {transform_indices = @transform_7, window_bounds = array<i64: 1, 1, 256>}, {transform_indices = @transform_8, window_bounds = array<i64: 1, 256, 128>}, {pipeline_mode = #tpu.pipeline_mode<synchronous>, transform_indices = @transform_9, window_bounds = array<i64: 128, 10>}, {pipeline_mode = #tpu.pipeline_mode<synchronous>, transform_indices = @transform_10, window_bounds = array<i64: 1, 10>}, {transform_indices = @transform_11, window_bounds = array<i64: 1, 2, 10>}]} {
    %c0_i32 = arith.constant 0 : i32
    %0 = arith.cmpi eq, %arg1, %c0_i32 : i32
    %1 = arith.extui %0 : i1 to i32
    %c0_i32_0 = arith.constant 0 : i32
    %2 = arith.cmpi ne, %1, %c0_i32_0 : i32
    scf.if %2 {
      %c0_44 = arith.constant 0 : index
      %c0_45 = arith.constant 0 : index
      %c0_46 = arith.constant 0 : index
      %104 = vector.load %arg2[%c0_44, %c0_45, %c0_46] : memref<2x16x48xbf16, #tpu.memory_space<vmem>>, vector<2x16x48xbf16>
      %105 = vector.shape_cast %104 : vector<2x16x48xbf16> to vector<32x48xbf16>
      %c0_47 = arith.constant 0 : index
      %c0_48 = arith.constant 0 : index
      %106 = vector.load %arg3[%c0_47, %c0_48] : memref<48x128xbf16, #tpu.memory_space<vmem>>, vector<48x128xbf16>
      %cst_49 = arith.constant dense<0.000000e+00> : vector<32x128xf32>
      %107 = tpu.matmul %105, %106, %cst_49 {dimension_numbers = #tpu.dot_dimension_numbers<[1], [0], [0], [1], [0, 0, 1, 1], [], []>} : vector<32x48xbf16>, vector<48x128xbf16>, vector<32x128xf32> -> vector<32x128xf32>
      %c0_50 = arith.constant 0 : index
      %c0_51 = arith.constant 0 : index
      %108 = vector.load %arg4[%c0_50, %c0_51] : memref<1x128xf32, #tpu.memory_space<vmem>>, vector<1x128xf32>
      %109 = vector.broadcast %108 : vector<1x128xf32> to vector<32x128xf32>
      %110 = arith.addf %107, %109 : vector<32x128xf32>
      %c0_52 = arith.constant 0 : index
      %c0_53 = arith.constant 0 : index
      %111 = vector.load %arg14[%c0_52, %c0_53] : memref<32x128xf32, #tpu.memory_space<vmem>>, vector<32x128xf32>
      tpu.vector_store %arg14[%c0_52, %c0_53], %110 {strides = array<i32>} : memref<32x128xf32, #tpu.memory_space<vmem>>, vector<32x128xf32>,
    } else {
    }
    %c0 = arith.constant 0 : index
    %c0_1 = arith.constant 0 : index
    %c0_2 = arith.constant 0 : index
    %3 = vector.load %arg5[%c0, %c0_1, %c0_2] : memref<1x8x128xf32, #tpu.memory_space<vmem>>, vector<1x8x128xf32>
    %4 = vector.shape_cast %3 : vector<1x8x128xf32> to vector<8x128xf32>
    %5 = vector.extract_strided_slice %4 {offsets = [0, 0], sizes = [1, 128], strides = [1, 1]} : vector<8x128xf32> to vector<1x128xf32>
    %6 = vector.extract_strided_slice %4 {offsets = [1, 0], sizes = [1, 128], strides = [1, 1]} : vector<8x128xf32> to vector<1x128xf32>
    %7 = vector.extract_strided_slice %4 {offsets = [2, 0], sizes = [1, 128], strides = [1, 1]} : vector<8x128xf32> to vector<1x128xf32>
    %8 = vector.extract_strided_slice %4 {offsets = [3, 0], sizes = [1, 128], strides = [1, 1]} : vector<8x128xf32> to vector<1x128xf32>
    %9 = vector.extract_strided_slice %4 {offsets = [4, 0], sizes = [1, 128], strides = [1, 1]} : vector<8x128xf32> to vector<1x128xf32>
    %10 = vector.extract_strided_slice %4 {offsets = [5, 0], sizes = [1, 128], strides = [1, 1]} : vector<8x128xf32> to vector<1x128xf32>
    %11 = vector.extract_strided_slice %4 {offsets = [6, 0], sizes = [1, 128], strides = [1, 1]} : vector<8x128xf32> to vector<1x128xf32>
    %12 = vector.extract_strided_slice %4 {offsets = [7, 0], sizes = [1, 128], strides = [1, 1]} : vector<8x128xf32> to vector<1x128xf32>
    %c0_3 = arith.constant 0 : index
    %c0_4 = arith.constant 0 : index
    %13 = vector.load %arg14[%c0_3, %c0_4] : memref<32x128xf32, #tpu.memory_space<vmem>>, vector<32x128xf32>
    %14 = vector.broadcast %5 : vector<1x128xf32> to vector<32x128xf32>
    %15 = arith.mulf %14, %13 : vector<32x128xf32>
    %16 = vector.broadcast %6 : vector<1x128xf32> to vector<32x128xf32>
    %17 = arith.addf %15, %16 : vector<32x128xf32>
    %18 = arith.truncf %17 : vector<32x128xf32> to vector<32x128xbf16>
    %19 = vector.extract_strided_slice %18 {offsets = [0, 0], sizes = [16, 128], strides = [1, 1]} : vector<32x128xbf16> to vector<16x128xbf16>
    %20 = vector.extract_strided_slice %18 {offsets = [16, 0], sizes = [16, 128], strides = [1, 1]} : vector<32x128xbf16> to vector<16x128xbf16>
    %21 = tpu.concatenate %19, %20 in 1 : vector<16x128xbf16>, vector<16x128xbf16> -> vector<16x256xbf16>
    %c0_5 = arith.constant 0 : index
    %c0_6 = arith.constant 0 : index
    %c0_7 = arith.constant 0 : index
    %22 = vector.load %arg6[%c0_5, %c0_6, %c0_7] : memref<1x16x16xbf16, #tpu.memory_space<vmem>>, vector<1x16x16xbf16>
    %23 = vector.shape_cast %22 : vector<1x16x16xbf16> to vector<16x16xbf16>
    %cst = arith.constant dense<0.000000e+00> : vector<16x256xf32>
    %24 = tpu.matmul %23, %21, %cst {dimension_numbers = #tpu.dot_dimension_numbers<[1], [0], [0], [1], [0, 0, 1, 1], [], []>} : vector<16x16xbf16>, vector<16x256xbf16>, vector<16x256xf32> -> vector<16x256xf32>
    %c0_8 = arith.constant 0 : index
    %c0_9 = arith.constant 0 : index
    %c0_10 = arith.constant 0 : index
    %25 = vector.load %arg7[%c0_8, %c0_9, %c0_10] : memref<1x16x1xf32, #tpu.memory_space<vmem>>, vector<1x16x1xf32>
    %26 = vector.shape_cast %25 : vector<1x16x1xf32> to vector<16x1xf32>
    %27 = vector.broadcast %26 : vector<16x1xf32> to vector<16x256xf32>
    %28 = arith.addf %24, %27 : vector<16x256xf32>
    %29 = vector.extract_strided_slice %28 {offsets = [0, 0], sizes = [16, 128], strides = [1, 1]} : vector<16x256xf32> to vector<16x128xf32>
    %30 = vector.extract_strided_slice %28 {offsets = [0, 128], sizes = [16, 128], strides = [1, 1]} : vector<16x256xf32> to vector<16x128xf32>
    %31 = tpu.concatenate %29, %30 in 0 : vector<16x128xf32>, vector<16x128xf32> -> vector<32x128xf32>
    %32 = vector.broadcast %7 : vector<1x128xf32> to vector<32x128xf32>
    %33 = arith.mulf %32, %31 : vector<32x128xf32>
    %34 = vector.broadcast %8 : vector<1x128xf32> to vector<32x128xf32>
    %35 = arith.addf %33, %34 : vector<32x128xf32>
    %36 = arith.addf %35, %17 : vector<32x128xf32>
    %c0_11 = arith.constant 0 : index
    %c0_12 = arith.constant 0 : index
    %37 = vector.load %arg14[%c0_11, %c0_12] : memref<32x128xf32, #tpu.memory_space<vmem>>, vector<32x128xf32>
    tpu.vector_store %arg14[%c0_11, %c0_12], %36 {strides = array<i32>} : memref<32x128xf32, #tpu.memory_space<vmem>>, vector<32x128xf32>,
    %c0_13 = arith.constant 0 : index
    %c0_14 = arith.constant 0 : index
    %38 = vector.load %arg14[%c0_13, %c0_14] : memref<32x128xf32, #tpu.memory_space<vmem>>, vector<32x128xf32>
    %39 = vector.broadcast %9 : vector<1x128xf32> to vector<32x128xf32>
    %40 = arith.mulf %39, %38 : vector<32x128xf32>
    %41 = vector.broadcast %10 : vector<1x128xf32> to vector<32x128xf32>
    %42 = arith.addf %40, %41 : vector<32x128xf32>
    %43 = arith.truncf %42 : vector<32x128xf32> to vector<32x128xbf16>
    %c0_15 = arith.constant 0 : index
    %c0_16 = arith.constant 0 : index
    %c0_17 = arith.constant 0 : index
    %44 = vector.load %arg8[%c0_15, %c0_16, %c0_17] : memref<1x128x256xbf16, #tpu.memory_space<vmem>>, vector<1x128x256xbf16>
    %45 = vector.shape_cast %44 : vector<1x128x256xbf16> to vector<128x256xbf16>
    %cst_18 = arith.constant dense<0.000000e+00> : vector<32x256xf32>
    %46 = tpu.matmul %43, %45, %cst_18 {dimension_numbers = #tpu.dot_dimension_numbers<[1], [0], [0], [1], [0, 0, 1, 1], [], []>} : vector<32x128xbf16>, vector<128x256xbf16>, vector<32x256xf32> -> vector<32x256xf32>
    %c0_19 = arith.constant 0 : index
    %c0_20 = arith.constant 0 : index
    %c0_21 = arith.constant 0 : index
    %47 = vector.load %arg9[%c0_19, %c0_20, %c0_21] : memref<1x1x256xf32, #tpu.memory_space<vmem>>, vector<1x1x256xf32>
    %48 = vector.shape_cast %47 : vector<1x1x256xf32> to vector<1x256xf32>
    %49 = vector.broadcast %48 : vector<1x256xf32> to vector<32x256xf32>
    %50 = arith.addf %46, %49 : vector<32x256xf32>
    %cst_22 = arith.constant 5.000000e-01 : f32
    %51 = vector.broadcast %cst_22 : f32 to vector<32x256xf32>
    %52 = arith.mulf %51, %50 : vector<32x256xf32>
    %cst_23 = arith.constant 0.707106769 : f32
    %53 = vector.broadcast %cst_23 : f32 to vector<32x256xf32>
    %54 = arith.mulf %50, %53 : vector<32x256xf32>
    %cst_24 = arith.constant 0.000000e+00 : f32
    %55 = vector.broadcast %cst_24 : f32 to vector<32x256xf32>
    %56 = arith.cmpf oge, %54, %55 : vector<32x256xf32>
    %cst_25 = arith.constant 1.000000e+00 : f32
    %cst_26 = arith.constant -1.000000e+00 : f32
    %57 = vector.broadcast %cst_25 : f32 to vector<32x256xf32>
    %58 = vector.broadcast %cst_26 : f32 to vector<32x256xf32>
    %59 = arith.select %56, %57, %58 : vector<32x256xi1>, vector<32x256xf32>
    %60 = math.absf %54 : vector<32x256xf32>
    %cst_27 = arith.constant 0.327591091 : f32
    %61 = vector.broadcast %cst_27 : f32 to vector<32x256xf32>
    %62 = arith.mulf %61, %60 : vector<32x256xf32>
    %cst_28 = arith.constant 1.000000e+00 : f32
    %63 = vector.broadcast %cst_28 : f32 to vector<32x256xf32>
    %64 = arith.addf %63, %62 : vector<32x256xf32>
    %65 = tpu.reciprocal %64 {approx = true} : vector<32x256xf32> -> vector<32x256xf32>
    %cst_29 = arith.constant 1.06140542 : f32
    %66 = vector.broadcast %cst_29 : f32 to vector<32x256xf32>
    %67 = arith.mulf %66, %65 : vector<32x256xf32>
    %cst_30 = arith.constant -1.45315206 : f32
    %68 = vector.broadcast %cst_30 : f32 to vector<32x256xf32>
    %69 = arith.addf %67, %68 : vector<32x256xf32>
    %70 = arith.mulf %69, %65 : vector<32x256xf32>
    %cst_31 = arith.constant 1.42141378 : f32
    %71 = vector.broadcast %cst_31 : f32 to vector<32x256xf32>
    %72 = arith.addf %70, %71 : vector<32x256xf32>
    %73 = arith.mulf %72, %65 : vector<32x256xf32>
    %cst_32 = arith.constant -0.284496725 : f32
    %74 = vector.broadcast %cst_32 : f32 to vector<32x256xf32>
    %75 = arith.addf %73, %74 : vector<32x256xf32>
    %76 = arith.mulf %75, %65 : vector<32x256xf32>
    %cst_33 = arith.constant 0.254829586 : f32
    %77 = vector.broadcast %cst_33 : f32 to vector<32x256xf32>
    %78 = arith.addf %76, %77 : vector<32x256xf32>
    %79 = arith.mulf %78, %65 : vector<32x256xf32>
    %cst_34 = arith.constant 0.000000e+00 : f32
    %80 = vector.broadcast %cst_34 : f32 to vector<32x256xf32>
    %81 = arith.subf %80, %60 : vector<32x256xf32>
    %82 = arith.mulf %81, %60 : vector<32x256xf32>
    %83 = math.exp %82 : vector<32x256xf32>
    %84 = arith.mulf %79, %83 : vector<32x256xf32>
    %cst_35 = arith.constant 1.000000e+00 : f32
    %85 = vector.broadcast %cst_35 : f32 to vector<32x256xf32>
    %86 = arith.subf %85, %84 : vector<32x256xf32>
    %87 = arith.mulf %59, %86 : vector<32x256xf32>
    %cst_36 = arith.constant 1.000000e+00 : f32
    %88 = vector.broadcast %cst_36 : f32 to vector<32x256xf32>
    %89 = arith.addf %88, %87 : vector<32x256xf32>
    %90 = arith.mulf %52, %89 : vector<32x256xf32>
    %91 = arith.truncf %90 : vector<32x256xf32> to vector<32x256xbf16>
    %c0_37 = arith.constant 0 : index
    %c0_38 = arith.constant 0 : index
    %c0_39 = arith.constant 0 : index
    %92 = vector.load %arg10[%c0_37, %c0_38, %c0_39] : memref<1x256x128xbf16, #tpu.memory_space<vmem>>, vector<1x256x128xbf16>
    %93 = vector.shape_cast %92 : vector<1x256x128xbf16> to vector<256x128xbf16>
    %cst_40 = arith.constant dense<0.000000e+00> : vector<32x128xf32>
    %94 = tpu.matmul %91, %93, %cst_40 {dimension_numbers = #tpu.dot_dimension_numbers<[1], [0], [0], [1], [0, 0, 1, 1], [], []>} : vector<32x256xbf16>, vector<256x128xbf16>, vector<32x128xf32> -> vector<32x128xf32>
    %95 = vector.broadcast %11 : vector<1x128xf32> to vector<32x128xf32>
    %96 = arith.mulf %95, %94 : vector<32x128xf32>
    %97 = vector.broadcast %12 : vector<1x128xf32> to vector<32x128xf32>
    %98 = arith.addf %96, %97 : vector<32x128xf32>
    %99 = arith.addf %98, %42 : vector<32x128xf32>
    %c0_41 = arith.constant 0 : index
    %c0_42 = arith.constant 0 : index
    %100 = vector.load %arg14[%c0_41, %c0_42] : memref<32x128xf32, #tpu.memory_space<vmem>>, vector<32x128xf32>
    tpu.vector_store %arg14[%c0_41, %c0_42], %99 {strides = array<i32>} : memref<32x128xf32, #tpu.memory_space<vmem>>, vector<32x128xf32>,
    %c1_i32 = arith.constant 1 : i32
    %101 = arith.cmpi eq, %arg1, %c1_i32 : i32
    %102 = arith.extui %101 : i1 to i32
    %c0_i32_43 = arith.constant 0 : i32
    %103 = arith.cmpi ne, %102, %c0_i32_43 : i32
    scf.if %103 {
      %c0_44 = arith.constant 0 : index
      %c0_45 = arith.constant 0 : index
      %104 = vector.load %arg14[%c0_44, %c0_45] : memref<32x128xf32, #tpu.memory_space<vmem>>, vector<16x128xf32>
      %cst_46 = arith.constant dense<0.000000e+00> : vector<128xf32>
      %105 = vector.multi_reduction <add>, %104, %cst_46 [0] : vector<16x128xf32> to vector<128xf32>
      %106 = vector.shape_cast %105 : vector<128xf32> to vector<1x128xf32>
      %cst_47 = arith.constant 1.600000e+01 : f32
      %107 = vector.broadcast %cst_47 : f32 to vector<1x128xf32>
      %108 = arith.divf %106, %107 : vector<1x128xf32>
      %c16 = arith.constant 16 : index
      %c0_48 = arith.constant 0 : index
      %109 = vector.load %arg14[%c16, %c0_48] : memref<32x128xf32, #tpu.memory_space<vmem>>, vector<16x128xf32>
      %cst_49 = arith.constant dense<0.000000e+00> : vector<128xf32>
      %110 = vector.multi_reduction <add>, %109, %cst_49 [0] : vector<16x128xf32> to vector<128xf32>
      %111 = vector.shape_cast %110 : vector<128xf32> to vector<1x128xf32>
      %cst_50 = arith.constant 1.600000e+01 : f32
      %112 = vector.broadcast %cst_50 : f32 to vector<1x128xf32>
      %113 = arith.divf %111, %112 : vector<1x128xf32>
      %114 = tpu.concatenate %108, %113 in 0 : vector<1x128xf32>, vector<1x128xf32> -> vector<2x128xf32>
      %115 = arith.truncf %114 : vector<2x128xf32> to vector<2x128xbf16>
      %c0_51 = arith.constant 0 : index
      %c0_52 = arith.constant 0 : index
      %116 = vector.load %arg11[%c0_51, %c0_52] : memref<128x10xbf16, #tpu.memory_space<vmem>>, vector<128x10xbf16>
      %cst_53 = arith.constant dense<0.000000e+00> : vector<2x10xf32>
      %117 = tpu.matmul %115, %116, %cst_53 {dimension_numbers = #tpu.dot_dimension_numbers<[1], [0], [0], [1], [0, 0, 1, 1], [], []>} : vector<2x128xbf16>, vector<128x10xbf16>, vector<2x10xf32> -> vector<2x10xf32>
      %c0_54 = arith.constant 0 : index
      %c0_55 = arith.constant 0 : index
      %118 = vector.load %arg12[%c0_54, %c0_55] : memref<1x10xf32, #tpu.memory_space<vmem>>, vector<1x10xf32>
      %119 = vector.broadcast %118 : vector<1x10xf32> to vector<2x10xf32>
      %120 = arith.addf %117, %119 : vector<2x10xf32>
      %c0_56 = arith.constant 0 : index
      %c0_57 = arith.constant 0 : index
      %c0_58 = arith.constant 0 : index
      %121 = vector.load %arg13[%c0_56, %c0_57, %c0_58] : memref<1x2x10xf32, #tpu.memory_space<vmem>>, vector<1x2x10xf32>
      %122 = vector.shape_cast %121 : vector<1x2x10xf32> to vector<2x10xf32>
      %123 = vector.shape_cast %120 : vector<2x10xf32> to vector<1x2x10xf32>
      tpu.vector_store %arg13[%c0_56, %c0_57, %c0_58], %123 {strides = array<i32>} : memref<1x2x10xf32, #tpu.memory_space<vmem>>, vector<1x2x10xf32>,
    } else {
    }
    return
  }
  func.func @transform_0(%arg0: i32, %arg1: i32) -> (i32, i32, i32) {
    %c0_i32 = arith.constant 0 : i32
    %c0_i32_0 = arith.constant 0 : i32
    %c0_i32_1 = arith.constant 0 : i32
    return %arg0, %c0_i32, %c0_i32_0 : i32, i32, i32
  }
  func.func @transform_1(%arg0: i32, %arg1: i32) -> (i32, i32) {
    %c0_i32 = arith.constant 0 : i32
    %c0_i32_0 = arith.constant 0 : i32
    %c0_i32_1 = arith.constant 0 : i32
    return %c0_i32, %c0_i32_0 : i32, i32
  }
  func.func @transform_2(%arg0: i32, %arg1: i32) -> (i32, i32) {
    %c0_i32 = arith.constant 0 : i32
    %c0_i32_0 = arith.constant 0 : i32
    %c0_i32_1 = arith.constant 0 : i32
    return %c0_i32, %c0_i32_0 : i32, i32
  }
  func.func @transform_3(%arg0: i32, %arg1: i32) -> (i32, i32, i32) {
    %c0_i32 = arith.constant 0 : i32
    %c0_i32_0 = arith.constant 0 : i32
    %c0_i32_1 = arith.constant 0 : i32
    return %arg1, %c0_i32, %c0_i32_0 : i32, i32, i32
  }
  func.func @transform_4(%arg0: i32, %arg1: i32) -> (i32, i32, i32) {
    %c0_i32 = arith.constant 0 : i32
    %c0_i32_0 = arith.constant 0 : i32
    %c0_i32_1 = arith.constant 0 : i32
    return %arg1, %c0_i32, %c0_i32_0 : i32, i32, i32
  }
  func.func @transform_5(%arg0: i32, %arg1: i32) -> (i32, i32, i32) {
    %c0_i32 = arith.constant 0 : i32
    %c0_i32_0 = arith.constant 0 : i32
    %c0_i32_1 = arith.constant 0 : i32
    return %arg1, %c0_i32, %c0_i32_0 : i32, i32, i32
  }
  func.func @transform_6(%arg0: i32, %arg1: i32) -> (i32, i32, i32) {
    %c0_i32 = arith.constant 0 : i32
    %c0_i32_0 = arith.constant 0 : i32
    %c0_i32_1 = arith.constant 0 : i32
    return %arg1, %c0_i32, %c0_i32_0 : i32, i32, i32
  }
  func.func @transform_7(%arg0: i32, %arg1: i32) -> (i32, i32, i32) {
    %c0_i32 = arith.constant 0 : i32
    %c0_i32_0 = arith.constant 0 : i32
    %c0_i32_1 = arith.constant 0 : i32
    return %arg1, %c0_i32, %c0_i32_0 : i32, i32, i32
  }
  func.func @transform_8(%arg0: i32, %arg1: i32) -> (i32, i32, i32) {
    %c0_i32 = arith.constant 0 : i32
    %c0_i32_0 = arith.constant 0 : i32
    %c0_i32_1 = arith.constant 0 : i32
    return %arg1, %c0_i32, %c0_i32_0 : i32, i32, i32
  }
  func.func @transform_9(%arg0: i32, %arg1: i32) -> (i32, i32) {
    %c0_i32 = arith.constant 0 : i32
    %c0_i32_0 = arith.constant 0 : i32
    %c0_i32_1 = arith.constant 0 : i32
    return %c0_i32, %c0_i32_0 : i32, i32
  }
  func.func @transform_10(%arg0: i32, %arg1: i32) -> (i32, i32) {
    %c0_i32 = arith.constant 0 : i32
    %c0_i32_0 = arith.constant 0 : i32
    %c0_i32_1 = arith.constant 0 : i32
    return %c0_i32, %c0_i32_0 : i32, i32
  }
  func.func @transform_11(%arg0: i32, %arg1: i32) -> (i32, i32, i32) {
    %c0_i32 = arith.constant 0 : i32
    %c0_i32_0 = arith.constant 0 : i32
    %c0_i32_1 = arith.constant 0 : i32
    return %arg0, %c0_i32, %c0_i32_0 : i32, i32, i32
  }
}

</mosaic_0001>

<llo_original>
// kernel: tpu_custom_call.1
$region0: #{tpu_custom_call.1}
  #allocation0 [shape = 'u32[]', space=smem, size = 0x4, offset = 0x4, fixed_abs, tag = 'smem constant byte address 0x4 - core index']
  #allocation1 [shape = 'u32[144,128]{1,0:T(1,128)}', space=vmem, size = 0x12000, scoped, tag = 'internal scratch']
  #allocation2 [shape = 'f32[32,128]{1,0:T(8,128)}', space=vmem, size = 0x4000, scoped, tag = 'scratch operand']
  %s0 = inlined_call_operand.vmem [shape: bf16[4,16,48], index: 0, kind: input, shape index: {}]
  %s1 = inlined_call_operand.vmem [shape: bf16[48,128], index: 1, kind: input, shape index: {}]
  %s2 = inlined_call_operand.vmem [shape: f32[1,128], index: 2, kind: input, shape index: {}]
  %s3 = inlined_call_operand.vmem [shape: f32[2,8,128], index: 3, kind: input, shape index: {}]
  %s4 = inlined_call_operand.vmem [shape: bf16[2,16,16], index: 4, kind: input, shape index: {}]
  %s5 = inlined_call_operand.vmem [shape: f32[2,16,1], index: 5, kind: input, shape index: {}]
  %s6 = inlined_call_operand.hbm [shape: bf16[2,128,256], index: 6, kind: input, shape index: {}]
  %s7 = inlined_call_operand.vmem [shape: f32[2,1,256], index: 7, kind: input, shape index: {}]
  %s8 = inlined_call_operand.hbm [shape: bf16[2,256,128], index: 8, kind: input, shape index: {}]
  %s9 = inlined_call_operand.vmem [shape: bf16[128,10], index: 9, kind: input, shape index: {}]
  %s10 = inlined_call_operand.vmem [shape: f32[1,10], index: 10, kind: input, shape index: {}]
  %s11 = inlined_call_operand.hbm [shape: f32[2,2,10], index: 11, kind: output, shape index: {}]
  %s12 = sld [smem:[#allocation0]]
  $region93: #{tpu_custom_call.1} parent=0
    _
  %s14 = ssub.s32 1, %s12
  %s15 = scalar_select 0, %s14, %s12
  $region1: #{tpu_custom_call.1} parent=0
    #allocation3 [shape = 'u8[131072]{0}', space=vmem, size = 0x20000, scoped, tag = 'input window, operand 6']
    #allocation4 [shape = 's32[2]{0}', space=sflag, size = 0x8, scoped, tag = 'scoped memory for tpu_custom_call.1']
    #allocation5 [shape = 's32[2]{0}', space=sflag, size = 0x8, scoped, tag = 'scoped memory for tpu_custom_call.1']
    #allocation6 [shape = 'u8[131072]{0}', space=vmem, size = 0x20000, scoped, tag = 'input window, operand 8']
    #allocation7 [shape = 's32[2]{0}', space=sflag, size = 0x8, scoped, tag = 'scoped memory for tpu_custom_call.1']
    #allocation8 [shape = 'u8[2048]{0}', space=vmem, size = 0x800, scoped, tag = 'output window, operand 0']
    %16 = vsyncpa [#allocation4], 0
    %s17 = scalar_lea.sflag [#allocation4], 1
    %18 = vsyncpa %s17, 0
    %19 = vsyncpa [#allocation7], 0
    %s20 = scalar_lea.sflag [#allocation7], 1
    %21 = vsyncpa %s20, 0
    %22 = vsyncpa [#allocation5], 0
    %s23 = scalar_lea.sflag [#allocation5], 1
    %24 = vsyncpa %s23, 0
    loop: start=0, step=1, limit=6
    $region2: #{tpu_custom_call.1} parent=1 // loop_pre_header
      _
    $region3: #{tpu_custom_call.1} parent=1 // loop_header
      %s26 = sphi 0, %s30
      %p27 = scmp.ge.s32.totalorder %s26, 6
      %s33 = sphi 0, %s45
      %s34 = sphi 0, %s41
      %s35 = sphi 0, %s33
      %s36 = sphi 0, %s34
      %s37 = sphi 0, %s35
      %s38 = sphi 0, %s36
      %s48 = sphi 0, %s50
      %s51 = sphi 0, %s48
      %s52 = sphi 0, %s51
      %s68 = sphi 0, %s52
      %s72 = sphi 0, %s72
      %s74 = sphi 0, %s72
      %s75 = sphi 0, %s74
      %s89 = sphi 0, %s75
      %s93 = sphi 0, %s93
      %s95 = sphi 0, %s93
      %s96 = sphi 0, %s95
      %s110 = sphi 0, %s96
      %s116 = sphi 0, %s118
      %s119 = sphi 0, %s116
      %s120 = sphi 0, %s119
      %s136 = sphi 0, %s120
      %s142 = sphi 0, %s144
      %s145 = sphi 0, %s142
      %s146 = sphi 0, %s145
      %s162 = sphi 0, %s146
      %s168 = sphi 0, %s170
      %s171 = sphi 0, %s168
      %s172 = sphi 0, %s171
      %s188 = sphi 0, %s172
      %s194 = sphi 0, %s196
      %s197 = sphi 0, %s194
      %s198 = sphi 0, %s197
      %s214 = sphi 0, %s198
      %s220 = sphi 0, %s222
      %s223 = sphi 0, %s220
      %s224 = sphi 0, %s223
      %s240 = sphi 0, %s224
      %s246 = sphi 0, %s248
      %s249 = sphi 0, %s246
      %s250 = sphi 0, %s249
      %s266 = sphi 0, %s250
      %s270 = sphi 0, %s270
      %s272 = sphi 0, %s270
      %s273 = sphi 0, %s272
      %s287 = sphi 0, %s273
      %s291 = sphi 0, %s291
      %s293 = sphi 0, %s291
      %s294 = sphi 0, %s293
      %s308 = sphi 0, %s294
      %s314 = sphi 0, %s316
      %s317 = sphi 0, %s314
      %s318 = sphi 0, %s317
      %s334 = sphi 0, %s318
    $region4: #{tpu_custom_call.1} parent=1 // loop_header_branch
      %29 = sbr.rel (%p27) target = $region8
    $region5: #{tpu_custom_call.1} parent=1 // loop_body
      %s31 = ssub.s32 %s26, 1
      %s32 = ssub.s32 %s26, 2
      %s39 = sadd.s32 1, %s34
      %p40 = scmp.ge.s32.totalorder %s39, 2
      %s41 = scalar_select %p40, 0, %s39
      %s42 = sadd.s32 1, %s33
      %s43 = scalar_select %p40, %s42, %s33
      %p44 = scmp.ge.s32.totalorder %s43, 2
      %s45 = scalar_select %p44, 0, %s43
      %s46 = ssub.s32 %s33, %s45
      %p47 = scmp.eq.s32.totalorder %s46, 0
      %s49 = sadd.s32 %s48, 1
      %s50 = scalar_select %p47, %s48, %s49
      %p53 = pneg %p47
      %p54 = scmp.eq.s32.totalorder %s26, 3
      %p55 = por %p53, %p54
      %p56 = scmp.ne.s32.totalorder %s48, %s51
      %p57 = scmp.eq.s32.totalorder %s26, 0
      %p58 = por %p56, %p57
      %p59 = scmp.ne.s32.totalorder %s48, %s51
      %p60 = scmp.eq.s32.totalorder %s31, 3
      %p61 = por %p59, %p60
      %p62 = scmp.ne.s32.totalorder %s51, %s52
      %p63 = scmp.eq.s32.totalorder %s31, 0
      %p64 = por %p62, %p63
      %p65 = scmp.ne.s32.totalorder %s51, %s52
      %p66 = scmp.eq.s32.totalorder %s32, 3
      %p67 = por %p65, %p66
      %p69 = scmp.ne.s32.totalorder %s52, %s68
      %p70 = scmp.eq.s32.totalorder %s32, 0
      %p71 = por %p69, %p70
      %s73 = sadd.s32 %s72, 1
      %p76 = scmp.eq.s32.totalorder %s26, 3
      %p77 = scmp.ne.s32.totalorder %s72, %s74
      %p78 = scmp.eq.s32.totalorder %s26, 0
      %p79 = por %p77, %p78
      %p80 = scmp.ne.s32.totalorder %s72, %s74
      %p81 = scmp.eq.s32.totalorder %s31, 3
      %p82 = por %p80, %p81
      %p83 = scmp.ne.s32.totalorder %s74, %s75
      %p84 = scmp.eq.s32.totalorder %s31, 0
      %p85 = por %p83, %p84
      %p86 = scmp.ne.s32.totalorder %s74, %s75
      %p87 = scmp.eq.s32.totalorder %s32, 3
      %p88 = por %p86, %p87
      %p90 = scmp.ne.s32.totalorder %s75, %s89
      %p91 = scmp.eq.s32.totalorder %s32, 0
      %p92 = por %p90, %p91
      %s94 = sadd.s32 %s93, 1
      %p97 = scmp.eq.s32.totalorder %s26, 3
      %p98 = scmp.ne.s32.totalorder %s93, %s95
      %p99 = scmp.eq.s32.totalorder %s26, 0
      %p100 = por %p98, %p99
      %p101 = scmp.ne.s32.totalorder %s93, %s95
      %p102 = scmp.eq.s32.totalorder %s31, 3
      %p103 = por %p101, %p102
      %p104 = scmp.ne.s32.totalorder %s95, %s96
      %p105 = scmp.eq.s32.totalorder %s31, 0
      %p106 = por %p104, %p105
      %p107 = scmp.ne.s32.totalorder %s95, %s96
      %p108 = scmp.eq.s32.totalorder %s32, 3
      %p109 = por %p107, %p108
      %p111 = scmp.ne.s32.totalorder %s96, %s110
      %p112 = scmp.eq.s32.totalorder %s32, 0
      %p113 = por %p111, %p112
      %s114 = ssub.s32 %s34, %s41
      %p115 = scmp.eq.s32.totalorder %s114, 0
      %s117 = sadd.s32 %s116, 1
      %s118 = scalar_select %p115, %s116, %s117
      %p121 = pneg %p115
      %p122 = scmp.eq.s32.totalorder %s26, 3
      %p123 = por %p121, %p122
      %p124 = scmp.ne.s32.totalorder %s116, %s119
      %p125 = scmp.eq.s32.totalorder %s26, 0
      %p126 = por %p124, %p125
      %p127 = scmp.ne.s32.totalorder %s116, %s119
      %p128 = scmp.eq.s32.totalorder %s31, 3
      %p129 = por %p127, %p128
      %p130 = scmp.ne.s32.totalorder %s119, %s120
      %p131 = scmp.eq.s32.totalorder %s31, 0
      %p132 = por %p130, %p131
      %p133 = scmp.ne.s32.totalorder %s119, %s120
      %p134 = scmp.eq.s32.totalorder %s32, 3
      %p135 = por %p133, %p134
      %p137 = scmp.ne.s32.totalorder %s120, %s136
      %p138 = scmp.eq.s32.totalorder %s32, 0
      %p139 = por %p137, %p138
      %s140 = ssub.s32 %s34, %s41
      %p141 = scmp.eq.s32.totalorder %s140, 0
      %s143 = sadd.s32 %s142, 1
      %s144 = scalar_select %p141, %s142, %s143
      %p147 = pneg %p141
      %p148 = scmp.eq.s32.totalorder %s26, 3
      %p149 = por %p147, %p148
      %p150 = scmp.ne.s32.totalorder %s142, %s145
      %p151 = scmp.eq.s32.totalorder %s26, 0
      %p152 = por %p150, %p151
      %p153 = scmp.ne.s32.totalorder %s142, %s145
      %p154 = scmp.eq.s32.totalorder %s31, 3
      %p155 = por %p153, %p154
      %p156 = scmp.ne.s32.totalorder %s145, %s146
      %p157 = scmp.eq.s32.totalorder %s31, 0
      %p158 = por %p156, %p157
      %p159 = scmp.ne.s32.totalorder %s145, %s146
      %p160 = scmp.eq.s32.totalorder %s32, 3
      %p161 = por %p159, %p160
      %p163 = scmp.ne.s32.totalorder %s146, %s162
      %p164 = scmp.eq.s32.totalorder %s32, 0
      %p165 = por %p163, %p164
      %s166 = ssub.s32 %s34, %s41
      %p167 = scmp.eq.s32.totalorder %s166, 0
      %s169 = sadd.s32 %s168, 1
      %s170 = scalar_select %p167, %s168, %s169
      %p173 = pneg %p167
      %p174 = scmp.eq.s32.totalorder %s26, 3
      %p175 = por %p173, %p174
      %p176 = scmp.ne.s32.totalorder %s168, %s171
      %p177 = scmp.eq.s32.totalorder %s26, 0
      %p178 = por %p176, %p177
      %p179 = scmp.ne.s32.totalorder %s168, %s171
      %p180 = scmp.eq.s32.totalorder %s31, 3
      %p181 = por %p179, %p180
      %p182 = scmp.ne.s32.totalorder %s171, %s172
      %p183 = scmp.eq.s32.totalorder %s31, 0
      %p184 = por %p182, %p183
      %p185 = scmp.ne.s32.totalorder %s171, %s172
      %p186 = scmp.eq.s32.totalorder %s32, 3
      %p187 = por %p185, %p186
      %p189 = scmp.ne.s32.totalorder %s172, %s188
      %p190 = scmp.eq.s32.totalorder %s32, 0
      %p191 = por %p189, %p190
      %s192 = ssub.s32 %s34, %s41
      %p193 = scmp.eq.s32.totalorder %s192, 0
      %s195 = sadd.s32 %s194, 1
      %s196 = scalar_select %p193, %s194, %s195
      %p199 = pneg %p193
      %p200 = scmp.eq.s32.totalorder %s26, 3
      %p201 = por %p199, %p200
      %p202 = scmp.ne.s32.totalorder %s194, %s197
      %p203 = scmp.eq.s32.totalorder %s26, 0
      %p204 = por %p202, %p203
      %p205 = scmp.ne.s32.totalorder %s194, %s197
      %p206 = scmp.eq.s32.totalorder %s31, 3
      %p207 = por %p205, %p206
      %p208 = scmp.ne.s32.totalorder %s197, %s198
      %p209 = scmp.eq.s32.totalorder %s31, 0
      %p210 = por %p208, %p209
      %p211 = scmp.ne.s32.totalorder %s197, %s198
      %p212 = scmp.eq.s32.totalorder %s32, 3
      %p213 = por %p211, %p212
      %p215 = scmp.ne.s32.totalorder %s198, %s214
      %p216 = scmp.eq.s32.totalorder %s32, 0
      %p217 = por %p215, %p216
      %s218 = ssub.s32 %s34, %s41
      %p219 = scmp.eq.s32.totalorder %s218, 0
      %s221 = sadd.s32 %s220, 1
      %s222 = scalar_select %p219, %s220, %s221
      %p225 = pneg %p219
      %p226 = scmp.eq.s32.totalorder %s26, 3
      %p227 = por %p225, %p226
      %p228 = scmp.ne.s32.totalorder %s220, %s223
      %p229 = scmp.eq.s32.totalorder %s26, 0
      %p230 = por %p228, %p229
      %p231 = scmp.ne.s32.totalorder %s220, %s223
      %p232 = scmp.eq.s32.totalorder %s31, 3
      %p233 = por %p231, %p232
      %p234 = scmp.ne.s32.totalorder %s223, %s224
      %p235 = scmp.eq.s32.totalorder %s31, 0
      %p236 = por %p234, %p235
      %p237 = scmp.ne.s32.totalorder %s223, %s224
      %p238 = scmp.eq.s32.totalorder %s32, 3
      %p239 = por %p237, %p238
      %p241 = scmp.ne.s32.totalorder %s224, %s240
      %p242 = scmp.eq.s32.totalorder %s32, 0
      %p243 = por %p241, %p242
      %s244 = ssub.s32 %s34, %s41
      %p245 = scmp.eq.s32.totalorder %s244, 0
      %s247 = sadd.s32 %s246, 1
      %s248 = scalar_select %p245, %s246, %s247
      %p251 = pneg %p245
      %p252 = scmp.eq.s32.totalorder %s26, 3
      %p253 = por %p251, %p252
      %p254 = scmp.ne.s32.totalorder %s246, %s249
      %p255 = scmp.eq.s32.totalorder %s26, 0
      %p256 = por %p254, %p255
      %p257 = scmp.ne.s32.totalorder %s246, %s249
      %p258 = scmp.eq.s32.totalorder %s31, 3
      %p259 = por %p257, %p258
      %p260 = scmp.ne.s32.totalorder %s249, %s250
      %p261 = scmp.eq.s32.totalorder %s31, 0
      %p262 = por %p260, %p261
      %p263 = scmp.ne.s32.totalorder %s249, %s250
      %p264 = scmp.eq.s32.totalorder %s32, 3
      %p265 = por %p263, %p264
      %p267 = scmp.ne.s32.totalorder %s250, %s266
      %p268 = scmp.eq.s32.totalorder %s32, 0
      %p269 = por %p267, %p268
      %s271 = sadd.s32 %s270, 1
      %p274 = scmp.eq.s32.totalorder %s26, 3
      %p275 = scmp.ne.s32.totalorder %s270, %s272
      %p276 = scmp.eq.s32.totalorder %s26, 0
      %p277 = por %p275, %p276
      %p278 = scmp.ne.s32.totalorder %s270, %s272
      %p279 = scmp.eq.s32.totalorder %s31, 3
      %p280 = por %p278, %p279
      %p281 = scmp.ne.s32.totalorder %s272, %s273
      %p282 = scmp.eq.s32.totalorder %s31, 0
      %p283 = por %p281, %p282
      %p284 = scmp.ne.s32.totalorder %s272, %s273
      %p285 = scmp.eq.s32.totalorder %s32, 3
      %p286 = por %p284, %p285
      %p288 = scmp.ne.s32.totalorder %s273, %s287
      %p289 = scmp.eq.s32.totalorder %s32, 0
      %p290 = por %p288, %p289
      %s292 = sadd.s32 %s291, 1
      %p295 = scmp.eq.s32.totalorder %s26, 3
      %p296 = scmp.ne.s32.totalorder %s291, %s293
      %p297 = scmp.eq.s32.totalorder %s26, 0
      %p298 = por %p296, %p297
      %p299 = scmp.ne.s32.totalorder %s291, %s293
      %p300 = scmp.eq.s32.totalorder %s31, 3
      %p301 = por %p299, %p300
      %p302 = scmp.ne.s32.totalorder %s293, %s294
      %p303 = scmp.eq.s32.totalorder %s31, 0
      %p304 = por %p302, %p303
      %p305 = scmp.ne.s32.totalorder %s293, %s294
      %p306 = scmp.eq.s32.totalorder %s32, 3
      %p307 = por %p305, %p306
      %p309 = scmp.ne.s32.totalorder %s294, %s308
      %p310 = scmp.eq.s32.totalorder %s32, 0
      %p311 = por %p309, %p310
      %s312 = ssub.s32 %s33, %s45
      %p313 = scmp.eq.s32.totalorder %s312, 0
      %s315 = sadd.s32 %s314, 1
      %s316 = scalar_select %p313, %s314, %s315
      %p319 = pneg %p313
      %p320 = scmp.eq.s32.totalorder %s26, 3
      %p321 = por %p319, %p320
      %p322 = scmp.ne.s32.totalorder %s314, %s317
      %p323 = scmp.eq.s32.totalorder %s26, 0
      %p324 = por %p322, %p323
      %p325 = scmp.ne.s32.totalorder %s314, %s317
      %p326 = scmp.eq.s32.totalorder %s31, 3
      %p327 = por %p325, %p326
      %p328 = scmp.ne.s32.totalorder %s317, %s318
      %p329 = scmp.eq.s32.totalorder %s31, 0
      %p330 = por %p328, %p329
      %p331 = scmp.ne.s32.totalorder %s317, %s318
      %p332 = scmp.eq.s32.totalorder %s32, 3
      %p333 = por %p331, %p332
      %p335 = scmp.ne.s32.totalorder %s318, %s334
      %p336 = scmp.eq.s32.totalorder %s32, 0
      %p337 = por %p335, %p336
      %p338 = scmp.le.s32.totalorder 1, %s26
      %p339 = scmp.lt.s32.totalorder %s26, 5
      %p340 = pnand %p338, %p339
      %p341 = pneg %p340
      // Predicated region
      $region9: #{tpu_custom_call.1} parent=5 // pred_check
        _
      $region10: #{tpu_custom_call.1} parent=5 // pred_check_branch
        %343 = sbr.rel (%p340) target = $region12
      $region11: #{tpu_custom_call.1} parent=5 // pred_region
        %s344 = ssub.s32 %s26, 1
        // Predicated region
        $region13: #{tpu_custom_call.1} parent=11 // pred_check
          %p345 = pneg %p85
        $region14: #{tpu_custom_call.1} parent=11 // pred_check_branch
          %347 = sbr.rel (%p345) target = $region16
        $region15: #{tpu_custom_call.1} parent=11 // pred_region
          _
        $region16: #{tpu_custom_call.1} parent=11 // pred_fallthru
          _
        // Predicated region
        $region17: #{tpu_custom_call.1} parent=11 // pred_check
          %p348 = pneg %p106
        $region18: #{tpu_custom_call.1} parent=11 // pred_check_branch
          %350 = sbr.rel (%p348) target = $region20
        $region19: #{tpu_custom_call.1} parent=11 // pred_region
          _
        $region20: #{tpu_custom_call.1} parent=11 // pred_fallthru
          _
        // Predicated region
        $region21: #{tpu_custom_call.1} parent=11 // pred_check
          %p351 = pneg %p283
        $region22: #{tpu_custom_call.1} parent=11 // pred_check_branch
          %353 = sbr.rel (%p351) target = $region24
        $region23: #{tpu_custom_call.1} parent=11 // pred_region
          _
        $region24: #{tpu_custom_call.1} parent=11 // pred_fallthru
          _
        // Predicated region
        $region25: #{tpu_custom_call.1} parent=11 // pred_check
          %p354 = pneg %p304
        $region26: #{tpu_custom_call.1} parent=11 // pred_check_branch
          %356 = sbr.rel (%p354) target = $region28
        $region27: #{tpu_custom_call.1} parent=11 // pred_region
          _
        $region28: #{tpu_custom_call.1} parent=11 // pred_fallthru
          _
      $region12: #{tpu_custom_call.1} parent=5 // pred_fallthru
        _
      %p357 = scmp.lt.s32.totalorder %s26, 4
      // Predicated region
      $region29: #{tpu_custom_call.1} parent=5 // pred_check
        %p358 = pneg %p357
      $region30: #{tpu_custom_call.1} parent=5 // pred_check_branch
        %360 = sbr.rel (%p358) target = $region32
      $region31: #{tpu_custom_call.1} parent=5 // pred_region
        // Predicated region
        $region33: #{tpu_custom_call.1} parent=31 // pred_check
          %p361 = pneg %p58
        $region34: #{tpu_custom_call.1} parent=31 // pred_check_branch
          %363 = sbr.rel (%p361) target = $region36
        $region35: #{tpu_custom_call.1} parent=31 // pred_region
          %s364 = smul.u32 2, %s33
          %p365 = scmp.lt.s32.totalorder %s364, 3
          %s366 = scalar_select %p365, %s364, 3
          %s367 = smul.addr %s366, 2
          %s368 = smul.addr %s367, 4
          %s369 = scalar_lea.vmem %s0, %s368
          %s370 = smul.u32 2, %s33
        $region36: #{tpu_custom_call.1} parent=31 // pred_fallthru
          _
        // Predicated region
        $region37: #{tpu_custom_call.1} parent=31 // pred_check
          %p371 = pneg %p126
        $region38: #{tpu_custom_call.1} parent=31 // pred_check_branch
          %373 = sbr.rel (%p371) target = $region40
        $region39: #{tpu_custom_call.1} parent=31 // pred_region
          %p374 = scmp.lt.s32.totalorder %s34, 1
          %s375 = scalar_select %p374, %s34, 1
          %s376 = smul.addr %s375, 8
          %s377 = scalar_lea.vmem %s3, %s376
        $region40: #{tpu_custom_call.1} parent=31 // pred_fallthru
          _
        // Predicated region
        $region41: #{tpu_custom_call.1} parent=31 // pred_check
          %p378 = pneg %p152
        $region42: #{tpu_custom_call.1} parent=31 // pred_check_branch
          %380 = sbr.rel (%p378) target = $region44
        $region43: #{tpu_custom_call.1} parent=31 // pred_region
          %p381 = scmp.lt.s32.totalorder %s34, 1
          %s382 = scalar_select %p381, %s34, 1
          %s383 = smul.addr %s382, 2
          %s384 = smul.addr %s383, 4
          %s385 = scalar_lea.vmem %s4, %s384
        $region44: #{tpu_custom_call.1} parent=31 // pred_fallthru
          _
        // Predicated region
        $region45: #{tpu_custom_call.1} parent=31 // pred_check
          %p386 = pneg %p178
        $region46: #{tpu_custom_call.1} parent=31 // pred_check_branch
          %388 = sbr.rel (%p386) target = $region48
        $region47: #{tpu_custom_call.1} parent=31 // pred_region
          %p389 = scmp.lt.s32.totalorder %s34, 1
          %s390 = scalar_select %p389, %s34, 1
          %s391 = smul.addr %s390, 2
          %s392 = smul.addr %s391, 8
          %s393 = scalar_lea.vmem %s5, %s392
        $region48: #{tpu_custom_call.1} parent=31 // pred_fallthru
          _
        // Predicated region
        $region49: #{tpu_custom_call.1} parent=31 // pred_check
          %p394 = pneg %p204
        $region50: #{tpu_custom_call.1} parent=31 // pred_check_branch
          %396 = sbr.rel (%p394) target = $region52
        $region51: #{tpu_custom_call.1} parent=31 // pred_region
          %s397 = sand.u32 %s194, 1
          %s398 = scalar_lea.sflag [#allocation4], %s397
          %s399 = sand.u32 %s194, 1
          %s400 = smul.addr %s399, 128
          %s401 = scalar_lea.vmem [#allocation3], %s400
          %s403 = ssub.s32 2048, 2048
          %404 = vsyncadd %s398, %s403
          %s405 = smul.addr %s34, 32
          %s406 = smul.addr %s405, 64
          %s407 = scalar_lea.hbm %s6, %s406
          %s408 = sshll.u32 %s401, 4
          %s409 = int_to_ptr.vmem [resolvable:$true] %s408
          %414 = dma.hbm_to_vmem [thread:$0]  %s407, 2048, %s409, %s398, 128, 128, 8
        $region52: #{tpu_custom_call.1} parent=31 // pred_fallthru
          _
        // Predicated region
        $region53: #{tpu_custom_call.1} parent=31 // pred_check
          %p415 = pneg %p230
        $region54: #{tpu_custom_call.1} parent=31 // pred_check_branch
          %417 = sbr.rel (%p415) target = $region56
        $region55: #{tpu_custom_call.1} parent=31 // pred_region
          %p418 = scmp.lt.s32.totalorder %s34, 1
          %s419 = scalar_select %p418, %s34, 1
          %s420 = smul.addr %s419, 2
          %s421 = scalar_lea.vmem %s7, %s420
        $region56: #{tpu_custom_call.1} parent=31 // pred_fallthru
          _
        // Predicated region
        $region57: #{tpu_custom_call.1} parent=31 // pred_check
          %p422 = pneg %p256
        $region58: #{tpu_custom_call.1} parent=31 // pred_check_branch
          %424 = sbr.rel (%p422) target = $region60
        $region59: #{tpu_custom_call.1} parent=31 // pred_region
          %s425 = sand.u32 %s246, 1
          %s426 = scalar_lea.sflag [#allocation7], %s425
          %s427 = sand.u32 %s246, 1
          %s428 = smul.addr %s427, 128
          %s429 = scalar_lea.vmem [#allocation6], %s428
          %s431 = ssub.s32 2048, 2048
          %432 = vsyncadd %s426, %s431
          %s433 = smul.addr %s34, 32
          %s434 = smul.addr %s433, 64
          %s435 = scalar_lea.hbm %s8, %s434
          %s436 = sshll.u32 %s429, 4
          %s437 = int_to_ptr.vmem [resolvable:$true] %s436
          %442 = dma.hbm_to_vmem [thread:$0]  %s435, 2048, %s437, %s426, 64, 64, 4
        $region60: #{tpu_custom_call.1} parent=31 // pred_fallthru
          _
      $region32: #{tpu_custom_call.1} parent=5 // pred_fallthru
        _
      %p443 = scmp.le.s32.totalorder 1, %s26
      %p444 = scmp.lt.s32.totalorder %s26, 5
      %p445 = pnand %p443, %p444
      %p446 = pneg %p445
      // Predicated region
      $region61: #{tpu_custom_call.1} parent=5 // pred_check
        _
      $region62: #{tpu_custom_call.1} parent=5 // pred_check_branch
        %448 = sbr.rel (%p445) target = $region64
      $region63: #{tpu_custom_call.1} parent=5 // pred_region
        %s449 = ssub.s32 %s26, 1
        %s450 = sand.u32 %s197, 1
        %s451 = scalar_lea.sflag [#allocation4], %s450
        %s452 = sand.u32 %s197, 1
        %s453 = smul.addr %s452, 128
        %s454 = scalar_lea.vmem [#allocation3], %s453
        // Predicated region
        $region65: #{tpu_custom_call.1} parent=63 // pred_check
          %p455 = pneg %p210
        $region66: #{tpu_custom_call.1} parent=63 // pred_check_branch
          %457 = sbr.rel (%p455) target = $region68
        $region67: #{tpu_custom_call.1} parent=63 // pred_region
          %458 = dma.done %s451, 2048
        $region68: #{tpu_custom_call.1} parent=63 // pred_fallthru
          _
        %s459 = sand.u32 %s249, 1
        %s460 = scalar_lea.sflag [#allocation7], %s459
        %s461 = sand.u32 %s249, 1
        %s462 = smul.addr %s461, 128
        %s463 = scalar_lea.vmem [#allocation6], %s462
        // Predicated region
        $region69: #{tpu_custom_call.1} parent=63 // pred_check
          %p464 = pneg %p262
        $region70: #{tpu_custom_call.1} parent=63 // pred_check_branch
          %466 = sbr.rel (%p464) target = $region72
        $region71: #{tpu_custom_call.1} parent=63 // pred_region
          %467 = dma.done %s460, 2048
        $region72: #{tpu_custom_call.1} parent=63 // pred_fallthru
          _
        %s468 = smul.u32 2, %s35
        %p469 = scmp.lt.s32.totalorder %s468, 3
        %s470 = scalar_select %p469, %s468, 3
        %s471 = smul.addr %s470, 2
        %s472 = smul.addr %s471, 4
        %s473 = scalar_lea.vmem %s0, %s472
        %p474 = pneg %p64
        %p475 = pneg %p61
        %p476 = pneg %p85
        %p477 = pneg %p82
        %p478 = pneg %p106
        %p479 = pneg %p103
        %p480 = scmp.lt.s32.totalorder %s36, 1
        %s481 = scalar_select %p480, %s36, 1
        %s482 = smul.addr %s481, 8
        %s483 = scalar_lea.vmem %s3, %s482
        %p484 = pneg %p132
        %p485 = pneg %p129
        %p486 = scmp.lt.s32.totalorder %s36, 1
        %s487 = scalar_select %p486, %s36, 1
        %s488 = smul.addr %s487, 2
        %s489 = smul.addr %s488, 4
        %s490 = scalar_lea.vmem %s4, %s489
        %p491 = pneg %p158
        %p492 = pneg %p155
        %p493 = scmp.lt.s32.totalorder %s36, 1
        %s494 = scalar_select %p493, %s36, 1
        %s495 = smul.addr %s494, 2
        %s496 = smul.addr %s495, 8
        %s497 = scalar_lea.vmem %s5, %s496
        %p498 = pneg %p184
        %p499 = pneg %p181
        %s500 = sand.u32 %s197, 1
        %s501 = scalar_lea.sflag [#allocation4], %s500
        %s502 = sand.u32 %s197, 1
        %s503 = smul.addr %s502, 128
        %s504 = scalar_lea.vmem [#allocation3], %s503
        %p505 = pneg %p210
        %p506 = pneg %p207
        %p507 = scmp.lt.s32.totalorder %s36, 1
        %s508 = scalar_select %p507, %s36, 1
        %s509 = smul.addr %s508, 2
        %s510 = scalar_lea.vmem %s7, %s509
        %p511 = pneg %p236
        %p512 = pneg %p233
        %s513 = sand.u32 %s249, 1
        %s514 = scalar_lea.sflag [#allocation7], %s513
        %s515 = sand.u32 %s249, 1
        %s516 = smul.addr %s515, 128
        %s517 = scalar_lea.vmem [#allocation6], %s516
        %p518 = pneg %p262
        %p519 = pneg %p259
        %p520 = pneg %p283
        %p521 = pneg %p280
        %p522 = pneg %p304
        %p523 = pneg %p301
        %p524 = pneg %p330
        %p525 = pneg %p327
        %s526 = sand.u32 %s317, 1
        %s527 = scalar_lea.sflag [#allocation5], %s526
        %s528 = sand.u32 %s317, 1
        %s529 = smul.addr %s528, 2
        %s530 = scalar_lea.vmem [#allocation8], %s529
        %s531 = smul.u32 2, %s35
        %p532 = scmp.lt.s32.totalorder %s531, 3
        %s533 = scalar_select %p532, %s531, 3
        %s534 = smul.addr %s533, 2
        %s535 = smul.addr %s534, 4
        %s536 = scalar_lea.vmem %s0, %s535
        %s537 = smul.u32 2, %s35
        %p538 = scmp.lt.s32.totalorder %s36, 1
        %s539 = scalar_select %p538, %s36, 1
        %s540 = smul.addr %s539, 8
        %s541 = scalar_lea.vmem %s3, %s540
        %p542 = scmp.lt.s32.totalorder %s36, 1
        %s543 = scalar_select %p542, %s36, 1
        %s544 = smul.addr %s543, 2
        %s545 = smul.addr %s544, 4
        %s546 = scalar_lea.vmem %s4, %s545
        %p547 = scmp.lt.s32.totalorder %s36, 1
        %s548 = scalar_select %p547, %s36, 1
        %s549 = smul.addr %s548, 2
        %s550 = smul.addr %s549, 8
        %s551 = scalar_lea.vmem %s5, %s550
        %p552 = scmp.lt.s32.totalorder %s36, 1
        %s553 = scalar_select %p552, %s36, 1
        %s554 = smul.addr %s553, 2
        %s555 = scalar_lea.vmem %s7, %s554
        %p557 = scmp.eq.s32.totalorder %s36, 0
        // Predicated region
        $region73: #{tpu_custom_call.1} parent=63 // pred_check
          %p558 = pneg %p557
        $region74: #{tpu_custom_call.1} parent=63 // pred_check_branch
          %560 = sbr.rel (%p558) target = $region76
        $region75: #{tpu_custom_call.1} parent=63 // pred_region
          %v561 = vld [vmem:[%s536] sm:$0xf]
          %v562 = vld [vmem:[%s536 + $0x4] sm:$0xf]
          %v563 = vld [vmem:[%s536 + $0x8] sm:$0xf]
          %v564 = vld [vmem:[%s536 + $0xc] sm:$0xf]
          %v565 = vld [vmem:[%s1] sm:$0xf]
          %v566 = vld [vmem:[%s1 + $0x4] sm:$0xf]
          %v567 = vld [vmem:[%s1 + $0x8] sm:$0xf]
          %v568 = vld [vmem:[%s1 + $0xc] sm:$0xf]
          %v569 = vld [vmem:[%s1 + $0x10] sm:$0xf]
          %v570 = vld [vmem:[%s1 + $0x14] sm:$0xf]
          %v571 = vld [vmem:[%s2] sm:$0x1]
          %v573 = vlaneseq
          %v574 = vshrl.u32 %v573, 7
          %v575 = vsub.s32 0, %v574
          %v576 = vrot.slane %v571, %v575
          %v582 = vunpack.c.l.b16 %v561
          %v583 = vunpack.c.l.b16 %v562
          %v584 = vunpack.c.l.b16 %v563
          %v585 = vunpack.c.l.b16 %v564
          %v586 = vpack.c.b16 %v583, %v582
          %v587 = vpack.c.b16 %v585, %v584
          %v594 = vunpack.c.l.b16 %v565
          %v595 = vunpack.c.l.b16 %v566
          %v596 = vunpack.c.l.b16 %v567
          %v597 = vunpack.c.l.b16 %v568
          %v598 = vunpack.c.l.b16 %v569
          %v599 = vunpack.c.l.b16 %v570
          %v600 = vpack.c.b16 %v595, %v594
          %v601 = vpack.c.b16 %v597, %v596
          %v602 = vpack.c.b16 %v599, %v598
          %vm606 = vcmask 392192
          %v608 = vsel %vm606, %v586, 0
          %v611 = vsel %vm606, %v587, 0
          %613 = vmatprep.subr.bf16.mxu0 0
          %614 = vmatpush1.bf16.msra.mxu0 %v600
          %615 = vmatprep.subr.bf16.mxu0 0
          %616 = vmatpush1.bf16.msra.mxu0 %v601
          %617 = vmatprep.subr.bf16.mxu0 0
          %618 = vmatpush1.bf16.msra.mxu0 %v602
          %619 = vmatprep.subr.bf16.mxu0 0
          %620 = vmatpush1.bf16.msra.mxu0 0
          %621 = vmatprep.subr.bf16.mxu0 0
          %622 = vmatpush1.bf16.msra.mxu0 0
          %623 = vmatprep.subr.bf16.mxu0 0
          %624 = vmatpush1.bf16.msra.mxu0 0
          %625 = vmatprep.subr.bf16.mxu0 0
          %626 = vmatpush1.bf16.msra.mxu0 0
          %627 = vmatprep.subr.bf16.mxu0 0
          %628 = vmatpush1.bf16.msra.mxu0 0
          %629 = vmatprep.subr.bf16.mxu0 0
          %630 = vmatpush1.bf16.msra.mxu0 0
          %631 = vmatprep.subr.bf16.mxu0 0
          %632 = vmatpush1.bf16.msra.mxu0 0
          %633 = vmatprep.subr.bf16.mxu0 0
          %634 = vmatpush1.bf16.msra.mxu0 0
          %635 = vmatprep.subr.bf16.mxu0 0
          %636 = vmatpush1.bf16.msra.mxu0 0
          %637 = vmatprep.subr.bf16.mxu0 0
          %638 = vmatpush1.bf16.msra.mxu0 0
          %639 = vmatprep.subr.bf16.mxu0 0
          %640 = vmatpush1.bf16.msra.mxu0 0
          %641 = vmatprep.subr.bf16.mxu0 0
          %642 = vmatpush1.bf16.msra.mxu0 0
          %643 = vmatprep.subr.bf16.mxu0 0
          %644 = vmatpush1.bf16.msra.mxu0 0
          %645 = vmatprep.mubr.bf16.mxu0 0
          %646 = vmatmul.mubr.bf16.gmra.mrb[0].mxu0 %v608
          %v647 = vpop.f32.mrb[0].mxu0
          %v648 = vadd.f32 %v576, %v647
          %v649 = vpop.f32.mrb[0].mxu0
          %v650 = vpop.f32.mrb[0].mxu0
          %v651 = vadd.f32 %v576, %v650
          %v652 = vpop.f32.mrb[0].mxu0
          %653 = vmatprep.mubr.bf16.mxu0 0
          %654 = vmatmul.mubr.bf16.gmra.mrb[0].mxu0 %v611
          %v655 = vpop.f32.mrb[0].mxu0
          %v656 = vadd.f32 %v576, %v655
          %v657 = vpop.f32.mrb[0].mxu0
          %v658 = vpop.f32.mrb[0].mxu0
          %v659 = vadd.f32 %v576, %v658
          %v660 = vpop.f32.mrb[0].mxu0
          %661 = vdwg.mxu0
          %662 = vst [vmem:[#allocation2] sm:$0xff] %v648
          %663 = vst [vmem:[#allocation2 + $0x8] sm:$0xff] %v651
          %664 = vst [vmem:[#allocation2 + $0x10] sm:$0xff] %v656
          %665 = vst [vmem:[#allocation2 + $0x18] sm:$0xff] %v659
        $region76: #{tpu_custom_call.1} parent=63 // pred_fallthru
          _
        %v666 = vld [vmem:[%s541] sm:$0xff]
        %v667 = vld [vmem:[#allocation2] sm:$0xff]
        %v668 = vld [vmem:[#allocation2 + $0x8] sm:$0xff]
        %v669 = vld [vmem:[#allocation2 + $0x10] sm:$0xff]
        %v670 = vld [vmem:[#allocation2 + $0x18] sm:$0xff]
        %v671 = vlaneseq
        %v672 = vshrl.u32 %v671, 7
        %v673 = vsub.s32 0, %v672
        %v674 = vrot.slane %v666, %v673
        %v675 = vmul.f32 %v674, %v667
        %v676 = vmul.f32 %v674, %v668
        %v677 = vmul.f32 %v674, %v669
        %v678 = vmul.f32 %v674, %v670
        %v679 = vlaneseq
        %v680 = vshrl.u32 %v679, 7
        %v681 = vsub.s32 1, %v680
        %v682 = vrot.slane %v666, %v681
        %v683 = vadd.f32 %v675, %v682
        %v684 = vadd.f32 %v676, %v682
        %v685 = vadd.f32 %v677, %v682
        %v686 = vadd.f32 %v678, %v682
        %v687 = vpack.c.bf16 %v684, %v683
        %v688 = vpack.c.bf16 %v686, %v685
        %v689 = vld [vmem:[%s546] sm:$0xf]
        %v690 = vld [vmem:[%s546 + $0x4] sm:$0xf]
        %v691 = vld [vmem:[%s551] sm:$0xff]
        %v692 = vld [vmem:[%s551 + $0x8] sm:$0xff]
        %694 = vset.pattern.permute.xlu0 0
        %695 = vperm.xlu0 %694, %v691
        %v696 = vpop.permute.xlu0 %695
        %699 = vset.pattern.permute.xlu0 0
        %700 = vperm.xlu0 %699, %v692
        %v701 = vpop.permute.xlu0 %700
        %v705 = vunpack.c.l.b16 %v689
        %v706 = vunpack.c.l.b16 %v690
        %v707 = vpack.c.b16 %v706, %v705
        %vm708 = vcmask 130048
        %v710 = vsel %vm708, %v707, 0
        %712 = vmatprep.subr.bf16.mxu0 %v688
        %713 = vmatpush1.bf16.msra.mxu0 %v687
        %714 = vmatprep.subr.bf16.mxu0 0
        %715 = vmatpush1.bf16.msra.mxu0 0
        %716 = vmatprep.subr.bf16.mxu0 0
        %717 = vmatpush1.bf16.msra.mxu0 0
        %718 = vmatprep.subr.bf16.mxu0 0
        %719 = vmatpush1.bf16.msra.mxu0 0
        %720 = vmatprep.subr.bf16.mxu0 0
        %721 = vmatpush1.bf16.msra.mxu0 0
        %722 = vmatprep.subr.bf16.mxu0 0
        %723 = vmatpush1.bf16.msra.mxu0 0
        %724 = vmatprep.subr.bf16.mxu0 0
        %725 = vmatpush1.bf16.msra.mxu0 0
        %726 = vmatprep.subr.bf16.mxu0 0
        %727 = vmatpush1.bf16.msra.mxu0 0
        %728 = vmatprep.subr.bf16.mxu0 0
        %729 = vmatpush1.bf16.msra.mxu0 0
        %730 = vmatprep.subr.bf16.mxu0 0
        %731 = vmatpush1.bf16.msra.mxu0 0
        %732 = vmatprep.subr.bf16.mxu0 0
        %733 = vmatpush1.bf16.msra.mxu0 0
        %734 = vmatprep.subr.bf16.mxu0 0
        %735 = vmatpush1.bf16.msra.mxu0 0
        %736 = vmatprep.subr.bf16.mxu0 0
        %737 = vmatpush1.bf16.msra.mxu0 0
        %738 = vmatprep.subr.bf16.mxu0 0
        %739 = vmatpush1.bf16.msra.mxu0 0
        %740 = vmatprep.subr.bf16.mxu0 0
        %741 = vmatpush1.bf16.msra.mxu0 0
        %742 = vmatprep.subr.bf16.mxu0 0
        %743 = vmatpush1.bf16.msra.mxu0 0
        %744 = vmatprep.mubr.bf16.mxu0 0
        %745 = vmatmul.mubr.bf16.gmra.mrb[0].mxu0 %v710
        %v746 = vpop.f32.mrb[0].mxu0
        %v747 = vadd.f32 %v696, %v746
        %v748 = vpop.f32.mrb[0].mxu0
        %v749 = vadd.f32 %v696, %v748
        %v750 = vpop.f32.mrb[0].mxu0
        %v751 = vadd.f32 %v701, %v750
        %v752 = vpop.f32.mrb[0].mxu0
        %v753 = vadd.f32 %v701, %v752
        %754 = vdwg.mxu0
        %v755 = vlaneseq
        %v756 = vshrl.u32 %v755, 7
        %v757 = vsub.s32 2, %v756
        %v758 = vrot.slane %v666, %v757
        %v759 = vmul.f32 %v758, %v747
        %v760 = vmul.f32 %v758, %v751
        %v761 = vmul.f32 %v758, %v749
        %v762 = vmul.f32 %v758, %v753
        %v763 = vlaneseq
        %v764 = vshrl.u32 %v763, 7
        %v765 = vsub.s32 3, %v764
        %v766 = vrot.slane %v666, %v765
        %v767 = vadd.f32 %v759, %v766
        %v768 = vadd.f32 %v760, %v766
        %v769 = vadd.f32 %v761, %v766
        %v770 = vadd.f32 %v762, %v766
        %v771 = vadd.f32 %v767, %v683
        %v772 = vadd.f32 %v768, %v684
        %v773 = vadd.f32 %v769, %v685
        %v774 = vadd.f32 %v770, %v686
        %775 = vst [vmem:[#allocation2] sm:$0xff] %v771
        %776 = vst [vmem:[#allocation2 + $0x8] sm:$0xff] %v772
        %777 = vst [vmem:[#allocation2 + $0x10] sm:$0xff] %v773
        %778 = vst [vmem:[#allocation2 + $0x18] sm:$0xff] %v774
        %v779 = vld [vmem:[#allocation2] sm:$0xff]
        %v780 = vld [vmem:[#allocation2 + $0x8] sm:$0xff]
        %v781 = vld [vmem:[#allocation2 + $0x10] sm:$0xff]
        %v782 = vld [vmem:[#allocation2 + $0x18] sm:$0xff]
        %v783 = vlaneseq
        %v784 = vshrl.u32 %v783, 7
        %v785 = vsub.s32 4, %v784
        %v786 = vrot.slane %v666, %v785
        %v787 = vmul.f32 %v786, %v779
        %v788 = vmul.f32 %v786, %v780
        %v789 = vmul.f32 %v786, %v781
        %v790 = vmul.f32 %v786, %v782
        %v791 = vlaneseq
        %v792 = vshrl.u32 %v791, 7
        %v793 = vsub.s32 5, %v792
        %v794 = vrot.slane %v666, %v793
        %v795 = vadd.f32 %v787, %v794
        %v796 = vadd.f32 %v788, %v794
        %v797 = vadd.f32 %v789, %v794
        %v798 = vadd.f32 %v790, %v794
        %v799 = vpack.c.bf16 %v796, %v795
        %v800 = vpack.c.bf16 %v798, %v797
        %v801 = vld [vmem:[%s454] sm:$0xff]
        %v802 = vld [vmem:[%s454 + $0x8] sm:$0xff]
        %v803 = vld [vmem:[%s454 + $0x10] sm:$0xff]
        %v804 = vld [vmem:[%s454 + $0x18] sm:$0xff]
        %v805 = vld [vmem:[%s454 + $0x20] sm:$0xff]
        %v806 = vld [vmem:[%s454 + $0x28] sm:$0xff]
        %v807 = vld [vmem:[%s454 + $0x30] sm:$0xff]
        %v808 = vld [vmem:[%s454 + $0x38] sm:$0xff]
        %v809 = vld [vmem:[%s454 + $0x40] sm:$0xff]
        %v810 = vld [vmem:[%s454 + $0x48] sm:$0xff]
        %v811 = vld [vmem:[%s454 + $0x50] sm:$0xff]
        %v812 = vld [vmem:[%s454 + $0x58] sm:$0xff]
        %v813 = vld [vmem:[%s454 + $0x60] sm:$0xff]
        %v814 = vld [vmem:[%s454 + $0x68] sm:$0xff]
        %v815 = vld [vmem:[%s454 + $0x70] sm:$0xff]
        %v816 = vld [vmem:[%s454 + $0x78] sm:$0xff]
        %v817 = vld [vmem:[%s555] sm:$0x3]
        %v819 = vlaneseq
        %v820 = vshrl.u32 %v819, 7
        %v821 = vsub.s32 0, %v820
        %v822 = vrot.slane %v817, %v821
        %v823 = vlaneseq
        %v824 = vshrl.u32 %v823, 7
        %v825 = vsub.s32 1, %v824
        %v826 = vrot.slane %v817, %v825
        %v845 = vunpack.c.l.b16 %v801
        %v846 = vunpack.c.h.b16 %v801
        %v847 = vunpack.c.l.b16 %v802
        %v848 = vunpack.c.h.b16 %v802
        %v849 = vunpack.c.l.b16 %v803
        %v850 = vunpack.c.h.b16 %v803
        %v851 = vunpack.c.l.b16 %v804
        %v852 = vunpack.c.h.b16 %v804
        %v853 = vunpack.c.l.b16 %v805
        %v854 = vunpack.c.h.b16 %v805
        %v855 = vunpack.c.l.b16 %v806
        %v856 = vunpack.c.h.b16 %v806
        %v857 = vunpack.c.l.b16 %v807
        %v858 = vunpack.c.h.b16 %v807
        %v859 = vunpack.c.l.b16 %v808
        %v860 = vunpack.c.h.b16 %v808
        %v861 = vunpack.c.l.b16 %v809
        %v862 = vunpack.c.h.b16 %v809
        %v863 = vunpack.c.l.b16 %v810
        %v864 = vunpack.c.h.b16 %v810
        %v865 = vunpack.c.l.b16 %v811
        %v866 = vunpack.c.h.b16 %v811
        %v867 = vunpack.c.l.b16 %v812
        %v868 = vunpack.c.h.b16 %v812
        %v869 = vunpack.c.l.b16 %v813
        %v870 = vunpack.c.h.b16 %v813
        %v871 = vunpack.c.l.b16 %v814
        %v872 = vunpack.c.h.b16 %v814
        %v873 = vunpack.c.l.b16 %v815
        %v874 = vunpack.c.h.b16 %v815
        %v875 = vunpack.c.l.b16 %v816
        %v876 = vunpack.c.h.b16 %v816
        %v877 = vpack.c.b16 %v847, %v845
        %v878 = vpack.c.b16 %v848, %v846
        %v879 = vpack.c.b16 %v851, %v849
        %v880 = vpack.c.b16 %v852, %v850
        %v881 = vpack.c.b16 %v855, %v853
        %v882 = vpack.c.b16 %v856, %v854
        %v883 = vpack.c.b16 %v859, %v857
        %v884 = vpack.c.b16 %v860, %v858
        %v885 = vpack.c.b16 %v863, %v861
        %v886 = vpack.c.b16 %v864, %v862
        %v887 = vpack.c.b16 %v867, %v865
        %v888 = vpack.c.b16 %v868, %v866
        %v889 = vpack.c.b16 %v871, %v869
        %v890 = vpack.c.b16 %v872, %v870
        %v891 = vpack.c.b16 %v875, %v873
        %v892 = vpack.c.b16 %v876, %v874
        %909 = vmatprep.subr.bf16.mxu0 %v878
        %910 = vmatpush1.bf16.msra.mxu0 %v877
        %911 = vmatprep.subr.bf16.mxu0 %v880
        %912 = vmatpush1.bf16.msra.mxu0 %v879
        %913 = vmatprep.subr.bf16.mxu0 %v882
        %914 = vmatpush1.bf16.msra.mxu0 %v881
        %915 = vmatprep.subr.bf16.mxu0 %v884
        %916 = vmatpush1.bf16.msra.mxu0 %v883
        %917 = vmatprep.subr.bf16.mxu0 %v886
        %918 = vmatpush1.bf16.msra.mxu0 %v885
        %919 = vmatprep.subr.bf16.mxu0 %v888
        %920 = vmatpush1.bf16.msra.mxu0 %v887
        %921 = vmatprep.subr.bf16.mxu0 %v890
        %922 = vmatpush1.bf16.msra.mxu0 %v889
        %923 = vmatprep.subr.bf16.mxu0 %v892
        %924 = vmatpush1.bf16.msra.mxu0 %v891
        %925 = vmatprep.subr.bf16.mxu0 0
        %926 = vmatpush1.bf16.msra.mxu0 0
        %927 = vmatprep.subr.bf16.mxu0 0
        %928 = vmatpush1.bf16.msra.mxu0 0
        %929 = vmatprep.subr.bf16.mxu0 0
        %930 = vmatpush1.bf16.msra.mxu0 0
        %931 = vmatprep.subr.bf16.mxu0 0
        %932 = vmatpush1.bf16.msra.mxu0 0
        %933 = vmatprep.subr.bf16.mxu0 0
        %934 = vmatpush1.bf16.msra.mxu0 0
        %935 = vmatprep.subr.bf16.mxu0 0
        %936 = vmatpush1.bf16.msra.mxu0 0
        %937 = vmatprep.subr.bf16.mxu0 0
        %938 = vmatpush1.bf16.msra.mxu0 0
        %939 = vmatprep.subr.bf16.mxu0 0
        %940 = vmatpush1.bf16.msra.mxu0 0
        %941 = vmatprep.mubr.bf16.mxu0 0
        %942 = vmatmul.mubr.bf16.gmra.mrb[0].mxu0 %v799
        %v943 = vpop.f32.mrb[0].mxu0
        %v944 = vadd.f32 %v822, %v943
        %v945 = vpop.f32.mrb[0].mxu0
        %v946 = vadd.f32 %v826, %v945
        %v947 = vpop.f32.mrb[0].mxu0
        %v948 = vadd.f32 %v822, %v947
        %v949 = vpop.f32.mrb[0].mxu0
        %v950 = vadd.f32 %v826, %v949
        %951 = vmatprep.mubr.bf16.mxu0 0
        %952 = vmatmul.mubr.bf16.gmra.mrb[0].mxu0 %v800
        %v953 = vpop.f32.mrb[0].mxu0
        %v954 = vadd.f32 %v822, %v953
        %v955 = vpop.f32.mrb[0].mxu0
        %v956 = vadd.f32 %v826, %v955
        %v957 = vpop.f32.mrb[0].mxu0
        %v958 = vadd.f32 %v822, %v957
        %v959 = vpop.f32.mrb[0].mxu0
        %v960 = vadd.f32 %v826, %v959
        %961 = vdwg.mxu0
        %v962 = vmul.f32 %v944, 0.5
        %v963 = vmul.f32 %v946, 0.5
        %v964 = vmul.f32 %v948, 0.5
        %v965 = vmul.f32 %v950, 0.5
        %v966 = vmul.f32 %v954, 0.5
        %v967 = vmul.f32 %v956, 0.5
        %v968 = vmul.f32 %v958, 0.5
        %v969 = vmul.f32 %v960, 0.5
        %v970 = vmul.f32 %v944, 0.70710677
        %v971 = vmul.f32 %v946, 0.70710677
        %v972 = vmul.f32 %v948, 0.70710677
        %v973 = vmul.f32 %v950, 0.70710677
        %v974 = vmul.f32 %v954, 0.70710677
        %v975 = vmul.f32 %v956, 0.70710677
        %v976 = vmul.f32 %v958, 0.70710677
        %v977 = vmul.f32 %v960, 0.70710677
        %vm978 = vcmp.ge.f32.partialorder %v970, 0.0
        %vm979 = vcmp.ge.f32.partialorder %v971, 0.0
        %vm980 = vcmp.ge.f32.partialorder %v972, 0.0
        %vm981 = vcmp.ge.f32.partialorder %v973, 0.0
        %vm982 = vcmp.ge.f32.partialorder %v974, 0.0
        %vm983 = vcmp.ge.f32.partialorder %v975, 0.0
        %vm984 = vcmp.ge.f32.partialorder %v976, 0.0
        %vm985 = vcmp.ge.f32.partialorder %v977, 0.0
        %v986 = vsel %vm978, 1.0, -1.0
        %v987 = vsel %vm979, 1.0, -1.0
        %v988 = vsel %vm980, 1.0, -1.0
        %v989 = vsel %vm981, 1.0, -1.0
        %v990 = vsel %vm982, 1.0, -1.0
        %v991 = vsel %vm983, 1.0, -1.0
        %v992 = vsel %vm984, 1.0, -1.0
        %v993 = vsel %vm985, 1.0, -1.0
        %v994 = vand.u32 2147483647, %v970
        %v995 = vand.u32 2147483647, %v971
        %v996 = vand.u32 2147483647, %v972
        %v997 = vand.u32 2147483647, %v973
        %v998 = vand.u32 2147483647, %v974
        %v999 = vand.u32 2147483647, %v975
        %v1000 = vand.u32 2147483647, %v976
        %v1001 = vand.u32 2147483647, %v977
        %v1002 = vmul.f32 %v994, 0.3275911
        %v1003 = vmul.f32 %v995, 0.3275911
        %v1004 = vmul.f32 %v996, 0.3275911
        %v1005 = vmul.f32 %v997, 0.3275911
        %v1006 = vmul.f32 %v998, 0.3275911
        %v1007 = vmul.f32 %v999, 0.3275911
        %v1008 = vmul.f32 %v1000, 0.3275911
        %v1009 = vmul.f32 %v1001, 0.3275911
        %v1010 = vadd.f32 %v1002, 1.0
        %v1011 = vadd.f32 %v1003, 1.0
        %v1012 = vadd.f32 %v1004, 1.0
        %v1013 = vadd.f32 %v1005, 1.0
        %v1014 = vadd.f32 %v1006, 1.0
        %v1015 = vadd.f32 %v1007, 1.0
        %v1016 = vadd.f32 %v1008, 1.0
        %v1017 = vadd.f32 %v1009, 1.0
        %v1018 = vrcp.pop %v1010
        %v1019 = vrcp.pop %v1011
        %v1020 = vrcp.pop %v1012
        %v1021 = vrcp.pop %v1013
        %v1022 = vrcp.pop %v1014
        %v1023 = vrcp.pop %v1015
        %v1024 = vrcp.pop %v1016
        %v1025 = vrcp.pop %v1017
        %v1026 = vmul.f32 %v1018, 1.0614054
        %v1027 = vmul.f32 %v1019, 1.0614054
        %v1028 = vmul.f32 %v1020, 1.0614054
        %v1029 = vmul.f32 %v1021, 1.0614054
        %v1030 = vmul.f32 %v1022, 1.0614054
        %v1031 = vmul.f32 %v1023, 1.0614054
        %v1032 = vmul.f32 %v1024, 1.0614054
        %v1033 = vmul.f32 %v1025, 1.0614054
        %v1034 = vadd.f32 %v1026, -1.4531521
        %v1035 = vadd.f32 %v1027, -1.4531521
        %v1036 = vadd.f32 %v1028, -1.4531521
        %v1037 = vadd.f32 %v1029, -1.4531521
        %v1038 = vadd.f32 %v1030, -1.4531521
        %v1039 = vadd.f32 %v1031, -1.4531521
        %v1040 = vadd.f32 %v1032, -1.4531521
        %v1041 = vadd.f32 %v1033, -1.4531521
        %v1042 = vmul.f32 %v1034, %v1018
        %v1043 = vmul.f32 %v1035, %v1019
        %v1044 = vmul.f32 %v1036, %v1020
        %v1045 = vmul.f32 %v1037, %v1021
        %v1046 = vmul.f32 %v1038, %v1022
        %v1047 = vmul.f32 %v1039, %v1023
        %v1048 = vmul.f32 %v1040, %v1024
        %v1049 = vmul.f32 %v1041, %v1025
        %v1050 = vadd.f32 %v1042, 1.4214138
        %v1051 = vadd.f32 %v1043, 1.4214138
        %v1052 = vadd.f32 %v1044, 1.4214138
        %v1053 = vadd.f32 %v1045, 1.4214138
        %v1054 = vadd.f32 %v1046, 1.4214138
        %v1055 = vadd.f32 %v1047, 1.4214138
        %v1056 = vadd.f32 %v1048, 1.4214138
        %v1057 = vadd.f32 %v1049, 1.4214138
        %v1058 = vmul.f32 %v1050, %v1018
        %v1059 = vmul.f32 %v1051, %v1019
        %v1060 = vmul.f32 %v1052, %v1020
        %v1061 = vmul.f32 %v1053, %v1021
        %v1062 = vmul.f32 %v1054, %v1022
        %v1063 = vmul.f32 %v1055, %v1023
        %v1064 = vmul.f32 %v1056, %v1024
        %v1065 = vmul.f32 %v1057, %v1025
        %v1066 = vadd.f32 %v1058, -0.28449672
        %v1067 = vadd.f32 %v1059, -0.28449672
        %v1068 = vadd.f32 %v1060, -0.28449672
        %v1069 = vadd.f32 %v1061, -0.28449672
        %v1070 = vadd.f32 %v1062, -0.28449672
        %v1071 = vadd.f32 %v1063, -0.28449672
        %v1072 = vadd.f32 %v1064, -0.28449672
        %v1073 = vadd.f32 %v1065, -0.28449672
        %v1074 = vmul.f32 %v1066, %v1018
        %v1075 = vmul.f32 %v1067, %v1019
        %v1076 = vmul.f32 %v1068, %v1020
        %v1077 = vmul.f32 %v1069, %v1021
        %v1078 = vmul.f32 %v1070, %v1022
        %v1079 = vmul.f32 %v1071, %v1023
        %v1080 = vmul.f32 %v1072, %v1024
        %v1081 = vmul.f32 %v1073, %v1025
        %v1082 = vadd.f32 %v1074, 0.2548296
        %v1083 = vadd.f32 %v1075, 0.2548296
        %v1084 = vadd.f32 %v1076, 0.2548296
        %v1085 = vadd.f32 %v1077, 0.2548296
        %v1086 = vadd.f32 %v1078, 0.2548296
        %v1087 = vadd.f32 %v1079, 0.2548296
        %v1088 = vadd.f32 %v1080, 0.2548296
        %v1089 = vadd.f32 %v1081, 0.2548296
        %v1090 = vmul.f32 %v1082, %v1018
        %v1091 = vmul.f32 %v1083, %v1019
        %v1092 = vmul.f32 %v1084, %v1020
        %v1093 = vmul.f32 %v1085, %v1021
        %v1094 = vmul.f32 %v1086, %v1022
        %v1095 = vmul.f32 %v1087, %v1023
        %v1096 = vmul.f32 %v1088, %v1024
        %v1097 = vmul.f32 %v1089, %v1025
        %v1098 = vsub.f32 0.0, %v994
        %v1099 = vsub.f32 0.0, %v995
        %v1100 = vsub.f32 0.0, %v996
        %v1101 = vsub.f32 0.0, %v997
        %v1102 = vsub.f32 0.0, %v998
        %v1103 = vsub.f32 0.0, %v999
        %v1104 = vsub.f32 0.0, %v1000
        %v1105 = vsub.f32 0.0, %v1001
        %v1106 = vmul.f32 %v1098, %v994
        %v1107 = vmul.f32 %v1099, %v995
        %v1108 = vmul.f32 %v1100, %v996
        %v1109 = vmul.f32 %v1101, %v997
        %v1110 = vmul.f32 %v1102, %v998
        %v1111 = vmul.f32 %v1103, %v999
        %v1112 = vmul.f32 %v1104, %v1000
        %v1113 = vmul.f32 %v1105, %v1001
        %v1114 = vmul.f32 %v1106, 1.442695
        %v1115 = vpow.pop %v1114
        %v1116 = vmul.f32 %v1107, 1.442695
        %v1117 = vpow.pop %v1116
        %v1118 = vmul.f32 %v1108, 1.442695
        %v1119 = vpow.pop %v1118
        %v1120 = vmul.f32 %v1109, 1.442695
        %v1121 = vpow.pop %v1120
        %v1122 = vmul.f32 %v1110, 1.442695
        %v1123 = vpow.pop %v1122
        %v1124 = vmul.f32 %v1111, 1.442695
        %v1125 = vpow.pop %v1124
        %v1126 = vmul.f32 %v1112, 1.442695
        %v1127 = vpow.pop %v1126
        %v1128 = vmul.f32 %v1113, 1.442695
        %v1129 = vpow.pop %v1128
        %v1130 = vmul.f32 %v1090, %v1115
        %v1131 = vmul.f32 %v1091, %v1117
        %v1132 = vmul.f32 %v1092, %v1119
        %v1133 = vmul.f32 %v1093, %v1121
        %v1134 = vmul.f32 %v1094, %v1123
        %v1135 = vmul.f32 %v1095, %v1125
        %v1136 = vmul.f32 %v1096, %v1127
        %v1137 = vmul.f32 %v1097, %v1129
        %v1138 = vsub.f32 1.0, %v1130
        %v1139 = vsub.f32 1.0, %v1131
        %v1140 = vsub.f32 1.0, %v1132
        %v1141 = vsub.f32 1.0, %v1133
        %v1142 = vsub.f32 1.0, %v1134
        %v1143 = vsub.f32 1.0, %v1135
        %v1144 = vsub.f32 1.0, %v1136
        %v1145 = vsub.f32 1.0, %v1137
        %v1146 = vmul.f32 %v986, %v1138
        %v1147 = vmul.f32 %v987, %v1139
        %v1148 = vmul.f32 %v988, %v1140
        %v1149 = vmul.f32 %v989, %v1141
        %v1150 = vmul.f32 %v990, %v1142
        %v1151 = vmul.f32 %v991, %v1143
        %v1152 = vmul.f32 %v992, %v1144
        %v1153 = vmul.f32 %v993, %v1145
        %v1154 = vadd.f32 %v1146, 1.0
        %v1155 = vadd.f32 %v1147, 1.0
        %v1156 = vadd.f32 %v1148, 1.0
        %v1157 = vadd.f32 %v1149, 1.0
        %v1158 = vadd.f32 %v1150, 1.0
        %v1159 = vadd.f32 %v1151, 1.0
        %v1160 = vadd.f32 %v1152, 1.0
        %v1161 = vadd.f32 %v1153, 1.0
        %v1162 = vmul.f32 %v962, %v1154
        %v1163 = vmul.f32 %v963, %v1155
        %v1164 = vmul.f32 %v964, %v1156
        %v1165 = vmul.f32 %v965, %v1157
        %v1166 = vmul.f32 %v966, %v1158
        %v1167 = vmul.f32 %v967, %v1159
        %v1168 = vmul.f32 %v968, %v1160
        %v1169 = vmul.f32 %v969, %v1161
        %v1170 = vpack.c.bf16 %v1164, %v1162
        %v1171 = vpack.c.bf16 %v1165, %v1163
        %v1172 = vpack.c.bf16 %v1168, %v1166
        %v1173 = vpack.c.bf16 %v1169, %v1167
        %v1174 = vld [vmem:[%s463] sm:$0xf]
        %v1175 = vld [vmem:[%s463 + $0x4] sm:$0xf]
        %v1176 = vld [vmem:[%s463 + $0x8] sm:$0xf]
        %v1177 = vld [vmem:[%s463 + $0xc] sm:$0xf]
        %v1178 = vld [vmem:[%s463 + $0x10] sm:$0xf]
        %v1179 = vld [vmem:[%s463 + $0x14] sm:$0xf]
        %v1180 = vld [vmem:[%s463 + $0x18] sm:$0xf]
        %v1181 = vld [vmem:[%s463 + $0x1c] sm:$0xf]
        %v1182 = vld [vmem:[%s463 + $0x20] sm:$0xf]
        %v1183 = vld [vmem:[%s463 + $0x24] sm:$0xf]
        %v1184 = vld [vmem:[%s463 + $0x28] sm:$0xf]
        %v1185 = vld [vmem:[%s463 + $0x2c] sm:$0xf]
        %v1186 = vld [vmem:[%s463 + $0x30] sm:$0xf]
        %v1187 = vld [vmem:[%s463 + $0x34] sm:$0xf]
        %v1188 = vld [vmem:[%s463 + $0x38] sm:$0xf]
        %v1189 = vld [vmem:[%s463 + $0x3c] sm:$0xf]
        %v1190 = vld [vmem:[%s463 + $0x40] sm:$0xf]
        %v1191 = vld [vmem:[%s463 + $0x44] sm:$0xf]
        %v1192 = vld [vmem:[%s463 + $0x48] sm:$0xf]
        %v1193 = vld [vmem:[%s463 + $0x4c] sm:$0xf]
        %v1194 = vld [vmem:[%s463 + $0x50] sm:$0xf]
        %v1195 = vld [vmem:[%s463 + $0x54] sm:$0xf]
        %v1196 = vld [vmem:[%s463 + $0x58] sm:$0xf]
        %v1197 = vld [vmem:[%s463 + $0x5c] sm:$0xf]
        %v1198 = vld [vmem:[%s463 + $0x60] sm:$0xf]
        %v1199 = vld [vmem:[%s463 + $0x64] sm:$0xf]
        %v1200 = vld [vmem:[%s463 + $0x68] sm:$0xf]
        %v1201 = vld [vmem:[%s463 + $0x6c] sm:$0xf]
        %v1202 = vld [vmem:[%s463 + $0x70] sm:$0xf]
        %v1203 = vld [vmem:[%s463 + $0x74] sm:$0xf]
        %v1204 = vld [vmem:[%s463 + $0x78] sm:$0xf]
        %v1205 = vld [vmem:[%s463 + $0x7c] sm:$0xf]
        %v1238 = vunpack.c.l.b16 %v1174
        %v1239 = vunpack.c.l.b16 %v1175
        %v1240 = vunpack.c.l.b16 %v1176
        %v1241 = vunpack.c.l.b16 %v1177
        %v1242 = vunpack.c.l.b16 %v1178
        %v1243 = vunpack.c.l.b16 %v1179
        %v1244 = vunpack.c.l.b16 %v1180
        %v1245 = vunpack.c.l.b16 %v1181
        %v1246 = vunpack.c.l.b16 %v1182
        %v1247 = vunpack.c.l.b16 %v1183
        %v1248 = vunpack.c.l.b16 %v1184
        %v1249 = vunpack.c.l.b16 %v1185
        %v1250 = vunpack.c.l.b16 %v1186
        %v1251 = vunpack.c.l.b16 %v1187
        %v1252 = vunpack.c.l.b16 %v1188
        %v1253 = vunpack.c.l.b16 %v1189
        %v1254 = vunpack.c.l.b16 %v1190
        %v1255 = vunpack.c.l.b16 %v1191
        %v1256 = vunpack.c.l.b16 %v1192
        %v1257 = vunpack.c.l.b16 %v1193
        %v1258 = vunpack.c.l.b16 %v1194
        %v1259 = vunpack.c.l.b16 %v1195
        %v1260 = vunpack.c.l.b16 %v1196
        %v1261 = vunpack.c.l.b16 %v1197
        %v1262 = vunpack.c.l.b16 %v1198
        %v1263 = vunpack.c.l.b16 %v1199
        %v1264 = vunpack.c.l.b16 %v1200
        %v1265 = vunpack.c.l.b16 %v1201
        %v1266 = vunpack.c.l.b16 %v1202
        %v1267 = vunpack.c.l.b16 %v1203
        %v1268 = vunpack.c.l.b16 %v1204
        %v1269 = vunpack.c.l.b16 %v1205
        %v1270 = vpack.c.b16 %v1239, %v1238
        %v1271 = vpack.c.b16 %v1241, %v1240
        %v1272 = vpack.c.b16 %v1243, %v1242
        %v1273 = vpack.c.b16 %v1245, %v1244
        %v1274 = vpack.c.b16 %v1247, %v1246
        %v1275 = vpack.c.b16 %v1249, %v1248
        %v1276 = vpack.c.b16 %v1251, %v1250
        %v1277 = vpack.c.b16 %v1253, %v1252
        %v1278 = vpack.c.b16 %v1255, %v1254
        %v1279 = vpack.c.b16 %v1257, %v1256
        %v1280 = vpack.c.b16 %v1259, %v1258
        %v1281 = vpack.c.b16 %v1261, %v1260
        %v1282 = vpack.c.b16 %v1263, %v1262
        %v1283 = vpack.c.b16 %v1265, %v1264
        %v1284 = vpack.c.b16 %v1267, %v1266
        %v1285 = vpack.c.b16 %v1269, %v1268
        %1302 = vmatprep.subr.bf16.mxu0 0
        %1303 = vmatpush1.bf16.msra.mxu0 %v1270
        %1304 = vmatprep.subr.bf16.mxu0 0
        %1305 = vmatpush1.bf16.msra.mxu0 %v1271
        %1306 = vmatprep.subr.bf16.mxu0 0
        %1307 = vmatpush1.bf16.msra.mxu0 %v1272
        %1308 = vmatprep.subr.bf16.mxu0 0
        %1309 = vmatpush1.bf16.msra.mxu0 %v1273
        %1310 = vmatprep.subr.bf16.mxu0 0
        %1311 = vmatpush1.bf16.msra.mxu0 %v1274
        %1312 = vmatprep.subr.bf16.mxu0 0
        %1313 = vmatpush1.bf16.msra.mxu0 %v1275
        %1314 = vmatprep.subr.bf16.mxu0 0
        %1315 = vmatpush1.bf16.msra.mxu0 %v1276
        %1316 = vmatprep.subr.bf16.mxu0 0
        %1317 = vmatpush1.bf16.msra.mxu0 %v1277
        %1318 = vmatprep.subr.bf16.mxu0 0
        %1319 = vmatpush1.bf16.msra.mxu0 %v1278
        %1320 = vmatprep.subr.bf16.mxu0 0
        %1321 = vmatpush1.bf16.msra.mxu0 %v1279
        %1322 = vmatprep.subr.bf16.mxu0 0
        %1323 = vmatpush1.bf16.msra.mxu0 %v1280
        %1324 = vmatprep.subr.bf16.mxu0 0
        %1325 = vmatpush1.bf16.msra.mxu0 %v1281
        %1326 = vmatprep.subr.bf16.mxu0 0
        %1327 = vmatpush1.bf16.msra.mxu0 %v1282
        %1328 = vmatprep.subr.bf16.mxu0 0
        %1329 = vmatpush1.bf16.msra.mxu0 %v1283
        %1330 = vmatprep.subr.bf16.mxu0 0
        %1331 = vmatpush1.bf16.msra.mxu0 %v1284
        %1332 = vmatprep.subr.bf16.mxu0 0
        %1333 = vmatpush1.bf16.msra.mxu0 %v1285
        %1334 = vmatprep.mubr.bf16.mxu0 %v1171
        %1335 = vmatmul.mubr.bf16.gmra.mrb[0].mxu0 %v1170
        %v1336 = vpop.f32.mrb[0].mxu0
        %v1337 = vadd.f32 0.0, %v1336
        %v1338 = vpop.f32.mrb[0].mxu0
        %v1339 = vpop.f32.mrb[0].mxu0
        %v1340 = vadd.f32 0.0, %v1339
        %v1341 = vpop.f32.mrb[0].mxu0
        %1342 = vmatprep.mubr.bf16.mxu0 %v1173
        %1343 = vmatmul.mubr.bf16.gmra.mrb[0].mxu0 %v1172
        %v1344 = vpop.f32.mrb[0].mxu0
        %v1345 = vadd.f32 0.0, %v1344
        %v1346 = vpop.f32.mrb[0].mxu0
        %v1347 = vpop.f32.mrb[0].mxu0
        %v1348 = vadd.f32 0.0, %v1347
        %v1349 = vpop.f32.mrb[0].mxu0
        %1350 = vdwg.mxu0
        %v1351 = vlaneseq
        %v1352 = vshrl.u32 %v1351, 7
        %v1353 = vsub.s32 6, %v1352
        %v1354 = vrot.slane %v666, %v1353
        %v1355 = vmul.f32 %v1354, %v1337
        %v1356 = vmul.f32 %v1354, %v1340
        %v1357 = vmul.f32 %v1354, %v1345
        %v1358 = vmul.f32 %v1354, %v1348
        %v1359 = vlaneseq
        %v1360 = vshrl.u32 %v1359, 7
        %v1361 = vsub.s32 7, %v1360
        %v1362 = vrot.slane %v666, %v1361
        %v1363 = vadd.f32 %v1355, %v1362
        %v1364 = vadd.f32 %v1356, %v1362
        %v1365 = vadd.f32 %v1357, %v1362
        %v1366 = vadd.f32 %v1358, %v1362
        %v1367 = vadd.f32 %v1363, %v795
        %v1368 = vadd.f32 %v1364, %v796
        %v1369 = vadd.f32 %v1365, %v797
        %v1370 = vadd.f32 %v1366, %v798
        %1371 = vst [vmem:[#allocation2] sm:$0xff] %v1367
        %1372 = vst [vmem:[#allocation2 + $0x8] sm:$0xff] %v1368
        %1373 = vst [vmem:[#allocation2 + $0x10] sm:$0xff] %v1369
        %1374 = vst [vmem:[#allocation2 + $0x18] sm:$0xff] %v1370
        %p1375 = scmp.eq.s32.totalorder %s36, 1
        // Predicated region
        $region77: #{tpu_custom_call.1} parent=63 // pred_check
          %p1376 = pneg %p1375
        $region78: #{tpu_custom_call.1} parent=63 // pred_check_branch
          %1378 = sbr.rel (%p1376) target = $region80
        $region79: #{tpu_custom_call.1} parent=63 // pred_region
          %v1379 = vld [vmem:[#allocation2] sm:$0xff]
          %v1380 = vld [vmem:[#allocation2 + $0x8] sm:$0xff]
          %v1381 = vadd.f32 %v1379, %v1380
          %v1382 = vrot.slane %v1381, 4
          %v1383 = vadd.f32 %v1381, %v1382
          %v1384 = vrot.slane %v1383, 2
          %v1385 = vadd.f32 %v1383, %v1384
          %v1386 = vrot.slane %v1385, 1
          %v1387 = vadd.f32 %v1385, %v1386
          %v1388 = vrcp.pop 16.0
          %v1389 = vmul.f32 %v1387, %v1388
          %v1390 = vld [vmem:[#allocation2 + $0x10] sm:$0xff]
          %v1391 = vld [vmem:[#allocation2 + $0x18] sm:$0xff]
          %v1392 = vadd.f32 %v1390, %v1391
          %v1393 = vrot.slane %v1392, 4
          %v1394 = vadd.f32 %v1392, %v1393
          %v1395 = vrot.slane %v1394, 2
          %v1396 = vadd.f32 %v1394, %v1395
          %v1397 = vrot.slane %v1396, 1
          %v1398 = vadd.f32 %v1396, %v1397
          %v1399 = vmul.f32 %v1398, %v1388
          %vm1400 = vcmask 1040384
          %v1401 = vsel %vm1400, %v1389, %v1399
          %v1402 = vpack.c.bf16 %v1401, %v1401
          %v1403 = vld [vmem:[%s9] sm:$0xf]
          %v1404 = vld [vmem:[%s9 + $0x4] sm:$0xf]
          %v1405 = vld [vmem:[%s9 + $0x8] sm:$0xf]
          %v1406 = vld [vmem:[%s9 + $0xc] sm:$0xf]
          %v1407 = vld [vmem:[%s9 + $0x10] sm:$0xf]
          %v1408 = vld [vmem:[%s9 + $0x14] sm:$0xf]
          %v1409 = vld [vmem:[%s9 + $0x18] sm:$0xf]
          %v1410 = vld [vmem:[%s9 + $0x1c] sm:$0xf]
          %v1411 = vld [vmem:[%s9 + $0x20] sm:$0xf]
          %v1412 = vld [vmem:[%s9 + $0x24] sm:$0xf]
          %v1413 = vld [vmem:[%s9 + $0x28] sm:$0xf]
          %v1414 = vld [vmem:[%s9 + $0x2c] sm:$0xf]
          %v1415 = vld [vmem:[%s9 + $0x30] sm:$0xf]
          %v1416 = vld [vmem:[%s9 + $0x34] sm:$0xf]
          %v1417 = vld [vmem:[%s9 + $0x38] sm:$0xf]
          %v1418 = vld [vmem:[%s9 + $0x3c] sm:$0xf]
          %v1419 = vld [vmem:[%s10] sm:$0x1]
          %v1421 = vlaneseq
          %v1422 = vshrl.u32 %v1421, 7
          %v1423 = vsub.s32 0, %v1422
          %v1424 = vrot.slane %v1419, %v1423
          %v1442 = vunpack.c.l.b16 %v1403
          %v1443 = vunpack.c.l.b16 %v1404
          %v1444 = vunpack.c.l.b16 %v1405
          %v1445 = vunpack.c.l.b16 %v1406
          %v1446 = vunpack.c.l.b16 %v1407
          %v1447 = vunpack.c.l.b16 %v1408
          %v1448 = vunpack.c.l.b16 %v1409
          %v1449 = vunpack.c.l.b16 %v1410
          %v1450 = vunpack.c.l.b16 %v1411
          %v1451 = vunpack.c.l.b16 %v1412
          %v1452 = vunpack.c.l.b16 %v1413
          %v1453 = vunpack.c.l.b16 %v1414
          %v1454 = vunpack.c.l.b16 %v1415
          %v1455 = vunpack.c.l.b16 %v1416
          %v1456 = vunpack.c.l.b16 %v1417
          %v1457 = vunpack.c.l.b16 %v1418
          %v1458 = vpack.c.b16 %v1443, %v1442
          %v1459 = vpack.c.b16 %v1445, %v1444
          %v1460 = vpack.c.b16 %v1447, %v1446
          %v1461 = vpack.c.b16 %v1449, %v1448
          %v1462 = vpack.c.b16 %v1451, %v1450
          %v1463 = vpack.c.b16 %v1453, %v1452
          %v1464 = vpack.c.b16 %v1455, %v1454
          %v1465 = vpack.c.b16 %v1457, %v1456
          %1474 = vmatprep.subr.bf16.mxu0 0
          %1475 = vmatpush1.bf16.msra.mxu0 %v1458
          %1476 = vmatprep.subr.bf16.mxu0 0
          %1477 = vmatpush1.bf16.msra.mxu0 %v1459
          %1478 = vmatprep.subr.bf16.mxu0 0
          %1479 = vmatpush1.bf16.msra.mxu0 %v1460
          %1480 = vmatprep.subr.bf16.mxu0 0
          %1481 = vmatpush1.bf16.msra.mxu0 %v1461
          %1482 = vmatprep.subr.bf16.mxu0 0
          %1483 = vmatpush1.bf16.msra.mxu0 %v1462
          %1484 = vmatprep.subr.bf16.mxu0 0
          %1485 = vmatpush1.bf16.msra.mxu0 %v1463
          %1486 = vmatprep.subr.bf16.mxu0 0
          %1487 = vmatpush1.bf16.msra.mxu0 %v1464
          %1488 = vmatprep.subr.bf16.mxu0 0
          %1489 = vmatpush1.bf16.msra.mxu0 %v1465
          %1490 = vmatprep.subr.bf16.mxu0 0
          %1491 = vmatpush1.bf16.msra.mxu0 0
          %1492 = vmatprep.subr.bf16.mxu0 0
          %1493 = vmatpush1.bf16.msra.mxu0 0
          %1494 = vmatprep.subr.bf16.mxu0 0
          %1495 = vmatpush1.bf16.msra.mxu0 0
          %1496 = vmatprep.subr.bf16.mxu0 0
          %1497 = vmatpush1.bf16.msra.mxu0 0
          %1498 = vmatprep.subr.bf16.mxu0 0
          %1499 = vmatpush1.bf16.msra.mxu0 0
          %1500 = vmatprep.subr.bf16.mxu0 0
          %1501 = vmatpush1.bf16.msra.mxu0 0
          %1502 = vmatprep.subr.bf16.mxu0 0
          %1503 = vmatpush1.bf16.msra.mxu0 0
          %1504 = vmatprep.subr.bf16.mxu0 0
          %1505 = vmatpush1.bf16.msra.mxu0 0
          %1506 = vmatprep.mubr.bf16.mxu0 0
          %1507 = vmatmul.mubr.bf16.gmra.mrb[0].mxu0 %v1402
          %v1508 = vpop.f32.mrb[0].mxu0
          %v1509 = vadd.f32 %v1424, %v1508
          %v1510 = vpop.f32.mrb[0].mxu0
          %v1511 = vpop.f32.mrb[0].mxu0
          %v1512 = vpop.f32.mrb[0].mxu0
          %1513 = vdwg.mxu0
          %vm1514 = vcmask 74752
          %1515 = vst.msk [vmem:[%s530] sm:$0x3] %vm1514, %v1509
        $region80: #{tpu_custom_call.1} parent=63 // pred_fallthru
          _
        %s1516 = sand.u32 %s317, 1
        %s1517 = scalar_lea.sflag [#allocation5], %s1516
        %s1518 = sand.u32 %s317, 1
        %s1519 = smul.addr %s1518, 2
        %s1520 = scalar_lea.vmem [#allocation8], %s1519
        // Predicated region
        $region81: #{tpu_custom_call.1} parent=63 // pred_check
          %p1521 = pneg %p327
        $region82: #{tpu_custom_call.1} parent=63 // pred_check_branch
          %1523 = sbr.rel (%p1521) target = $region84
        $region83: #{tpu_custom_call.1} parent=63 // pred_region
          %s1525 = ssub.s32 32, 32
          %1526 = vsyncadd %s1517, %s1525
          %s1527 = smul.addr %s35, 32
          %s1528 = scalar_lea.hbm %s11, %s1527
          %s1530 = sshll.u32 %s1520, 4
          %s1531 = int_to_ptr.vmem [resolvable:$true] %s1530
          %1533 = dma.vmem_to_hbm [thread:$0]  %s1531, 32, %s1528, %s1517
        $region84: #{tpu_custom_call.1} parent=63 // pred_fallthru
          _
      $region64: #{tpu_custom_call.1} parent=5 // pred_fallthru
        _
      %p1534 = scmp.le.s32.totalorder 2, %s26
      // Predicated region
      $region85: #{tpu_custom_call.1} parent=5 // pred_check
        %p1535 = pneg %p1534
      $region86: #{tpu_custom_call.1} parent=5 // pred_check_branch
        %1537 = sbr.rel (%p1535) target = $region88
      $region87: #{tpu_custom_call.1} parent=5 // pred_region
        %s1538 = ssub.s32 %s26, 2
        // Predicated region
        $region89: #{tpu_custom_call.1} parent=87 // pred_check
          %p1539 = pneg %p333
        $region90: #{tpu_custom_call.1} parent=87 // pred_check_branch
          %1541 = sbr.rel (%p1539) target = $region92
        $region91: #{tpu_custom_call.1} parent=87 // pred_region
          %s1542 = sand.u32 %s318, 1
          %s1543 = scalar_lea.sflag [#allocation5], %s1542
          %s1544 = sand.u32 %s318, 1
          %s1545 = smul.addr %s1544, 2
          %s1546 = scalar_lea.vmem [#allocation8], %s1545
          %1547 = dma.done %s1543, 32
        $region92: #{tpu_custom_call.1} parent=87 // pred_fallthru
          _
      $region88: #{tpu_custom_call.1} parent=5 // pred_fallthru
        _
    $region6: #{tpu_custom_call.1} parent=1 // loop_footer
      %s30 = sadd.s32 1, %s26
    $region7: #{tpu_custom_call.1} parent=1 // loop_footer_branch
      %25 = sbr.rel target = $region3
    $region8: #{tpu_custom_call.1} parent=1 // loop_exit
      _
    %1548 = vsyncpa [#allocation4], 1
    %s1549 = scalar_lea.sflag [#allocation4], 1
    %1550 = vsyncpa %s1549, 1
    %1551 = vsyncpa [#allocation7], 1
    %s1552 = scalar_lea.sflag [#allocation7], 1
    %1553 = vsyncpa %s1552, 1
    %1554 = vsyncpa [#allocation5], 1
    %s1555 = scalar_lea.sflag [#allocation5], 1
    %1556 = vsyncpa %s1555, 1

</llo_original>
